<compile_context>
chip_gen: v7x
topology: tpu7x:2x2x1
jax: 0.10.0
libtpu: 0.0.40
codegen_flags: <defaults>
</compile_context>

<pallas_src>
import jax
import jax.numpy as jnp
from jax.experimental import pallas as pl
from jax.experimental.pallas import tpu as pltpu


def _round_up(x, m):
    return (x + m - 1) // m * m


def _sigmoid(x):
    # tanh form: same math as 1/(1+exp(-x)), runs on the EUP, no inf intermediates.
    return 0.5 * (jnp.tanh(0.5 * x) + 1.0)


def run_seq2seq(x_enc2d, x_dec2d, enc_wih, enc_whh, enc_b,
                dec_wih, dec_whh, dec_b, wd, bd, *, Bp, T_enc, T_dec):
    """x_enc2d: (T_enc*Bp, E), x_dec2d: (T_dec*Bp, H) -> (T_dec*Bp, Vp) logits."""
    TBe, E = x_enc2d.shape
    TBd, H = x_dec2d.shape
    Vp = wd.shape[1]
    H4 = 4 * H

    def kernel(enc_x_ref, dec_x_ref,
               enc_wih_ref, enc_whh_ref, enc_b_ref,
               dec_wih_ref, dec_whh_ref, dec_b_ref,
               wd_ref, bd_ref, out_ref):
        enc_whh_w = enc_whh_ref[...]
        dec_whh_w = dec_whh_ref[...]

        # (1) Hoisted input projections: one big matmul per phase, off the serial chain.
        xw_enc = (jnp.dot(enc_x_ref[...], enc_wih_ref[...],
                          preferred_element_type=jnp.float32) + enc_b_ref[...])
        xw_dec = (jnp.dot(dec_x_ref[...], dec_wih_ref[...],
                          preferred_element_type=jnp.float32) + dec_b_ref[...])

        def lstm_step(xw_t, h, c, whh):
            # single MXU push per step on the critical path
            z = xw_t + jnp.dot(h, whh, preferred_element_type=jnp.float32)
            # (3) one EUP push over the full (Bp, 4H) vreg; i/f/o derived with VPU math
            th = jnp.tanh(0.5 * z)
            i = 0.5 * (th[:, 0 * H:1 * H] + 1.0)
            f = 0.5 * (th[:, 1 * H:2 * H] + 1.0)
            o = 0.5 * (th[:, 3 * H:4 * H] + 1.0)
            g = jnp.tanh(z[:, 2 * H:3 * H])
            c_new = f * c + i * g
            h_new = o * jnp.tanh(c_new)
            return h_new, c_new

        h = jnp.zeros((Bp, H), jnp.float32)
        c = jnp.zeros((Bp, H), jnp.float32)

        # Encoder phase: only final (h, c) carried forward (encoder_outputs unused).
        for t in range(T_enc):             # static trip count -> fully unrolled, aligned slices
            h, c = lstm_step(xw_enc[t * Bp:(t + 1) * Bp, :], h, c, enc_whh_w)

        # Decoder phase: (2) keep every hidden state in vregs (no VMEM scratch slab).
        hs = []
        for t in range(T_dec):
            h, c = lstm_step(xw_dec[t * Bp:(t + 1) * Bp, :], h, c, dec_whh_w)
            hs.append(h)
        hs_all = jnp.concatenate(hs, axis=0)            # (T_dec*Bp, H)

        # One batched dense over all decoder steps -> lane-dense (T_dec*Bp, Vp) store.
        logits = (jnp.dot(hs_all, wd_ref[...],
                          preferred_element_type=jnp.float32) + bd_ref[...])
        out_ref[...] = logits.astype(out_ref.dtype)

    full2d = lambda shp: pl.BlockSpec(shp, lambda i: (0, 0))

    # (4) advisory cost estimate for XLA scheduling around the call
    n_steps = T_enc + T_dec
    flops = 2 * (TBe * E * H4 + TBd * H * H4 + n_steps * Bp * H * H4 + TBd * H * Vp)
    transcendentals = n_steps * (Bp * H4 + 2 * Bp * H)
    bytes_accessed = 4 * (x_enc2d.size + x_dec2d.size + enc_wih.size + enc_whh.size
                          + enc_b.size + dec_wih.size + dec_whh.size + dec_b.size
                          + wd.size + bd.size + TBd * Vp)

    return pl.pallas_call(
        kernel,
        out_shape=jax.ShapeDtypeStruct((TBd, Vp), jnp.float32),
        grid_spec=pltpu.PrefetchScalarGridSpec(
            num_scalar_prefetch=0,
            grid=(1,),
            in_specs=[
                full2d((TBe, E)),
                full2d((TBd, H)),
                full2d((E, H4)),
                full2d((H, H4)),
                full2d((1, H4)),
                full2d((H, H4)),
                full2d((H, H4)),
                full2d((1, H4)),
                full2d((H, Vp)),
                full2d((1, Vp)),
            ],
            out_specs=pl.BlockSpec((TBd, Vp), lambda i: (0, 0)),
        ),
        compiler_params=pltpu.CompilerParams(
            dimension_semantics=("arbitrary",)),
        cost_estimate=pl.CostEstimate(
            flops=int(flops),
            transcendentals=int(transcendentals),
            bytes_accessed=int(bytes_accessed)),
    )(x_enc2d, x_dec2d, enc_wih, enc_whh, enc_b, dec_wih, dec_whh, dec_b, wd, bd)


# ---------------- parameters (deterministic synthetic init, stacked-gate layout) ----------

def init_params(key, embedding_size, lstm_nodes, num_words_output):
    H = lstm_nodes
    scale = 1.0 / jnp.sqrt(jnp.float32(H))
    ks = jax.random.split(key, 11)
    u = lambda k, shp: jax.random.uniform(k, shp, jnp.float32, -scale, scale)
    return {
        # encoder LSTM: input = embedding_size ; gates stacked along output dim (i,f,g,o)
        "enc_wih": u(ks[0], (embedding_size, 4 * H)),
        "enc_whh": u(ks[1], (H, 4 * H)),
        "enc_b":   u(ks[2], (1, 4 * H)) + u(ks[3], (1, 4 * H)),   # b_ih + b_hh
        # decoder embedding
        "dec_emb": jax.random.normal(ks[4], (num_words_output, H), jnp.float32),
        # decoder LSTM: input = lstm_nodes
        "dec_wih": u(ks[5], (H, 4 * H)),
        "dec_whh": u(ks[6], (H, 4 * H)),
        "dec_b":   u(ks[7], (1, 4 * H)) + u(ks[8], (1, 4 * H)),
        # dense: hidden -> vocab
        "dense_w": u(ks[9], (H, num_words_output)),
        "dense_b": u(ks[10], (1, num_words_output)),
    }


def seq2seq_forward(params, encoder_inputs, decoder_inputs):
    """encoder_inputs: (B, T_enc, E) f32 ; decoder_inputs: (B, T_dec) int32 -> (B, T_dec, V)."""
    B, T_enc, E = encoder_inputs.shape
    T_dec = decoder_inputs.shape[1]
    H = params["enc_whh"].shape[0]
    V = params["dense_w"].shape[1]
    Bp = _round_up(B, 8)        # fill the 8-sublane tile
    Vp = _round_up(V, 128)      # lane-dense output stores

    # time-major + batch padding, flattened to 2D slabs for the hoisted input projections
    x_enc = jnp.transpose(encoder_inputs, (1, 0, 2))                  # (T_enc, B, E)
    x_enc = jnp.pad(x_enc, ((0, 0), (0, Bp - B), (0, 0))).reshape(T_enc * Bp, E)

    # TODO(synk): decoder embedding gather stays in XLA (jnp.take); an in-kernel
    # scalar-prefetch gather is possible but not worth the lowering risk at this size.
    dec_emb = jnp.take(params["dec_emb"], decoder_inputs, axis=0)     # (B, T_dec, H)
    x_dec = jnp.transpose(dec_emb, (1, 0, 2))                         # (T_dec, B, H)
    x_dec = jnp.pad(x_dec, ((0, 0), (0, Bp - B), (0, 0))).reshape(T_dec * Bp, H)

    # vocab padding for the dense layer
    wd = jnp.pad(params["dense_w"], ((0, 0), (0, Vp - V)))
    bd = jnp.pad(params["dense_b"], ((0, 0), (0, Vp - V)))

    out2d = run_seq2seq(x_enc, x_dec,
                        params["enc_wih"], params["enc_whh"], params["enc_b"],
                        params["dec_wih"], params["dec_whh"], params["dec_b"],
                        wd, bd, Bp=Bp, T_enc=T_enc, T_dec=T_dec)      # (T_dec*Bp, Vp)
    out = out2d.reshape(T_dec, Bp, Vp)[:, :B, :V]                     # strip padding
    return jnp.transpose(out, (1, 0, 2))                              # (B, T_dec, V)


# ---------------- pure-JAX reference (for correctness check) ----------------

def _lstm_ref(x_tm, h0, c0, wih, whh, b):
    H = h0.shape[1]

    def step(carry, x_t):
        h, c = carry
        z = x_t @ wih + h @ whh + b
        i = _sigmoid(z[:, 0 * H:1 * H])
        f = _sigmoid(z[:, 1 * H:2 * H])
        g = jnp.tanh(z[:, 2 * H:3 * H])
        o = _sigmoid(z[:, 3 * H:4 * H])
        c = f * c + i * g
        h = o * jnp.tanh(c)
        return (h, c), h

    (h, c), hs = jax.lax.scan(step, (h0, c0), x_tm)
    return hs, h, c


def seq2seq_ref(params, encoder_inputs, decoder_inputs):
    B = encoder_inputs.shape[0]
    H = params["enc_whh"].shape[0]
    x_enc = jnp.transpose(encoder_inputs, (1, 0, 2))
    zeros = jnp.zeros((B, H), jnp.float32)
    _, h, c = _lstm_ref(x_enc, zeros, zeros,
                        params["enc_wih"], params["enc_whh"], params["enc_b"])
    dec_emb = jnp.take(params["dec_emb"], decoder_inputs, axis=0)
    x_dec = jnp.transpose(dec_emb, (1, 0, 2))
    hs, _, _ = _lstm_ref(x_dec, h, c,
                         params["dec_wih"], params["dec_whh"], params["dec_b"])
    logits = jnp.einsum("tbh,hv->tbv", hs, params["dense_w"]) + params["dense_b"][None]
    return jnp.transpose(logits, (1, 0, 2))


if __name__ == "__main__":
    B, T_enc, T_dec = 2, 8, 8
    E, H, V = 32, 32, 40            # embedding_size, lstm_nodes, num_words_output

    key = jax.random.PRNGKey(0)
    kp, kx, kd = jax.random.split(key, 3)
    params = init_params(kp, E, H, V)
    encoder_inputs = jax.random.normal(kx, (B, T_enc, E), jnp.float32)
    decoder_inputs = jax.random.randint(kd, (B, T_dec), 0, V, jnp.int32)

    fwd = jax.jit(seq2seq_forward)
    out = jax.block_until_ready(fwd(params, encoder_inputs, decoder_inputs))

    ref = seq2seq_ref(params, encoder_inputs, decoder_inputs)
    assert out.shape == (B, T_dec, V), out.shape
    assert jnp.allclose(out, ref, atol=1e-4, rtol=1e-4), "mismatch vs JAX reference"

    print("KERNEL_OK")
</pallas_src>

<mosaic_0001>
module attributes {stable_mosaic.version = 11 : i64} {
  func.func @kernel(%arg0: i32, %arg1: memref<64x32xf32, #tpu.memory_space<vmem>>, %arg2: memref<64x32xf32, #tpu.memory_space<vmem>>, %arg3: memref<32x128xf32, #tpu.memory_space<vmem>>, %arg4: memref<32x128xf32, #tpu.memory_space<vmem>>, %arg5: memref<1x128xf32, #tpu.memory_space<vmem>>, %arg6: memref<32x128xf32, #tpu.memory_space<vmem>>, %arg7: memref<32x128xf32, #tpu.memory_space<vmem>>, %arg8: memref<1x128xf32, #tpu.memory_space<vmem>>, %arg9: memref<32x128xf32, #tpu.memory_space<vmem>>, %arg10: memref<1x128xf32, #tpu.memory_space<vmem>>, %arg11: memref<64x128xf32, #tpu.memory_space<vmem>>) attributes {dimension_semantics = [#tpu.dimension_semantics<arbitrary>], iteration_bounds = array<i64: 1>, scalar_prefetch = 0 : i64, scratch_operands = 0 : i64, tpu.core_type = #tpu.core_type<tc>, window_params = [{pipeline_mode = #tpu.pipeline_mode<synchronous>, transform_indices = @transform_0, window_bounds = array<i64: 64, 32>}, {pipeline_mode = #tpu.pipeline_mode<synchronous>, transform_indices = @transform_1, window_bounds = array<i64: 64, 32>}, {pipeline_mode = #tpu.pipeline_mode<synchronous>, transform_indices = @transform_2, window_bounds = array<i64: 32, 128>}, {pipeline_mode = #tpu.pipeline_mode<synchronous>, transform_indices = @transform_3, window_bounds = array<i64: 32, 128>}, {pipeline_mode = #tpu.pipeline_mode<synchronous>, transform_indices = @transform_4, window_bounds = array<i64: 1, 128>}, {pipeline_mode = #tpu.pipeline_mode<synchronous>, transform_indices = @transform_5, window_bounds = array<i64: 32, 128>}, {pipeline_mode = #tpu.pipeline_mode<synchronous>, transform_indices = @transform_6, window_bounds = array<i64: 32, 128>}, {pipeline_mode = #tpu.pipeline_mode<synchronous>, transform_indices = @transform_7, window_bounds = array<i64: 1, 128>}, {pipeline_mode = #tpu.pipeline_mode<synchronous>, transform_indices = @transform_8, window_bounds = array<i64: 32, 128>}, {pipeline_mode = #tpu.pipeline_mode<synchronous>, transform_indices = @transform_9, window_bounds = array<i64: 1, 128>}, {pipeline_mode = #tpu.pipeline_mode<synchronous>, transform_indices = @transform_10, window_bounds = array<i64: 64, 128>}]} {
    %c0 = arith.constant 0 : index
    %c0_0 = arith.constant 0 : index
    %0 = vector.load %arg4[%c0, %c0_0] : memref<32x128xf32, #tpu.memory_space<vmem>>, vector<32x128xf32>
    %c0_1 = arith.constant 0 : index
    %c0_2 = arith.constant 0 : index
    %1 = vector.load %arg7[%c0_1, %c0_2] : memref<32x128xf32, #tpu.memory_space<vmem>>, vector<32x128xf32>
    %c0_3 = arith.constant 0 : index
    %c0_4 = arith.constant 0 : index
    %2 = vector.load %arg1[%c0_3, %c0_4] : memref<64x32xf32, #tpu.memory_space<vmem>>, vector<64x32xf32>
    %c0_5 = arith.constant 0 : index
    %c0_6 = arith.constant 0 : index
    %3 = vector.load %arg3[%c0_5, %c0_6] : memref<32x128xf32, #tpu.memory_space<vmem>>, vector<32x128xf32>
    %cst = arith.constant dense<0.000000e+00> : vector<64x128xf32>
    %4 = tpu.matmul %2, %3, %cst {dimension_numbers = #tpu.dot_dimension_numbers<[1], [0], [0], [1], [0, 0, 1, 1], [], []>} : vector<64x32xf32>, vector<32x128xf32>, vector<64x128xf32> -> vector<64x128xf32>
    %c0_7 = arith.constant 0 : index
    %c0_8 = arith.constant 0 : index
    %5 = vector.load %arg5[%c0_7, %c0_8] : memref<1x128xf32, #tpu.memory_space<vmem>>, vector<1x128xf32>
    %6 = vector.broadcast %5 : vector<1x128xf32> to vector<64x128xf32>
    %7 = arith.addf %4, %6 : vector<64x128xf32>
    %c0_9 = arith.constant 0 : index
    %c0_10 = arith.constant 0 : index
    %8 = vector.load %arg2[%c0_9, %c0_10] : memref<64x32xf32, #tpu.memory_space<vmem>>, vector<64x32xf32>
    %c0_11 = arith.constant 0 : index
    %c0_12 = arith.constant 0 : index
    %9 = vector.load %arg6[%c0_11, %c0_12] : memref<32x128xf32, #tpu.memory_space<vmem>>, vector<32x128xf32>
    %cst_13 = arith.constant dense<0.000000e+00> : vector<64x128xf32>
    %10 = tpu.matmul %8, %9, %cst_13 {dimension_numbers = #tpu.dot_dimension_numbers<[1], [0], [0], [1], [0, 0, 1, 1], [], []>} : vector<64x32xf32>, vector<32x128xf32>, vector<64x128xf32> -> vector<64x128xf32>
    %c0_14 = arith.constant 0 : index
    %c0_15 = arith.constant 0 : index
    %11 = vector.load %arg8[%c0_14, %c0_15] : memref<1x128xf32, #tpu.memory_space<vmem>>, vector<1x128xf32>
    %12 = vector.broadcast %11 : vector<1x128xf32> to vector<64x128xf32>
    %13 = arith.addf %10, %12 : vector<64x128xf32>
    %cst_16 = arith.constant 0.000000e+00 : f32
    %14 = vector.broadcast %cst_16 : f32 to vector<8x32xf32>
    %cst_17 = arith.constant 0.000000e+00 : f32
    %15 = vector.broadcast %cst_17 : f32 to vector<8x32xf32>
    %16 = vector.extract_strided_slice %7 {offsets = [0, 0], sizes = [8, 128], strides = [1, 1]} : vector<64x128xf32> to vector<8x128xf32>
    %cst_18 = arith.constant dense<0.000000e+00> : vector<8x128xf32>
    %17 = tpu.matmul %14, %0, %cst_18 {dimension_numbers = #tpu.dot_dimension_numbers<[1], [0], [0], [1], [0, 0, 1, 1], [], []>} : vector<8x32xf32>, vector<32x128xf32>, vector<8x128xf32> -> vector<8x128xf32>
    %18 = arith.addf %16, %17 : vector<8x128xf32>
    %cst_19 = arith.constant 5.000000e-01 : f32
    %19 = vector.broadcast %cst_19 : f32 to vector<8x128xf32>
    %20 = arith.mulf %19, %18 : vector<8x128xf32>
    %21 = math.tanh %20 : vector<8x128xf32>
    %22 = vector.extract_strided_slice %21 {offsets = [0, 0], sizes = [8, 32], strides = [1, 1]} : vector<8x128xf32> to vector<8x32xf32>
    %cst_20 = arith.constant 1.000000e+00 : f32
    %23 = vector.broadcast %cst_20 : f32 to vector<8x32xf32>
    %24 = arith.addf %22, %23 : vector<8x32xf32>
    %cst_21 = arith.constant 5.000000e-01 : f32
    %25 = vector.broadcast %cst_21 : f32 to vector<8x32xf32>
    %26 = arith.mulf %25, %24 : vector<8x32xf32>
    %27 = vector.extract_strided_slice %21 {offsets = [0, 32], sizes = [8, 32], strides = [1, 1]} : vector<8x128xf32> to vector<8x32xf32>
    %cst_22 = arith.constant 1.000000e+00 : f32
    %28 = vector.broadcast %cst_22 : f32 to vector<8x32xf32>
    %29 = arith.addf %27, %28 : vector<8x32xf32>
    %cst_23 = arith.constant 5.000000e-01 : f32
    %30 = vector.broadcast %cst_23 : f32 to vector<8x32xf32>
    %31 = arith.mulf %30, %29 : vector<8x32xf32>
    %32 = vector.extract_strided_slice %21 {offsets = [0, 96], sizes = [8, 32], strides = [1, 1]} : vector<8x128xf32> to vector<8x32xf32>
    %cst_24 = arith.constant 1.000000e+00 : f32
    %33 = vector.broadcast %cst_24 : f32 to vector<8x32xf32>
    %34 = arith.addf %32, %33 : vector<8x32xf32>
    %cst_25 = arith.constant 5.000000e-01 : f32
    %35 = vector.broadcast %cst_25 : f32 to vector<8x32xf32>
    %36 = arith.mulf %35, %34 : vector<8x32xf32>
    %37 = vector.extract_strided_slice %18 {offsets = [0, 64], sizes = [8, 32], strides = [1, 1]} : vector<8x128xf32> to vector<8x32xf32>
    %38 = math.tanh %37 : vector<8x32xf32>
    %39 = arith.mulf %31, %15 : vector<8x32xf32>
    %40 = arith.mulf %26, %38 : vector<8x32xf32>
    %41 = arith.addf %39, %40 : vector<8x32xf32>
    %42 = math.tanh %41 : vector<8x32xf32>
    %43 = arith.mulf %36, %42 : vector<8x32xf32>
    %44 = vector.extract_strided_slice %7 {offsets = [8, 0], sizes = [8, 128], strides = [1, 1]} : vector<64x128xf32> to vector<8x128xf32>
    %cst_26 = arith.constant dense<0.000000e+00> : vector<8x128xf32>
    %45 = tpu.matmul %43, %0, %cst_26 {dimension_numbers = #tpu.dot_dimension_numbers<[1], [0], [0], [1], [0, 0, 1, 1], [], []>} : vector<8x32xf32>, vector<32x128xf32>, vector<8x128xf32> -> vector<8x128xf32>
    %46 = arith.addf %44, %45 : vector<8x128xf32>
    %cst_27 = arith.constant 5.000000e-01 : f32
    %47 = vector.broadcast %cst_27 : f32 to vector<8x128xf32>
    %48 = arith.mulf %47, %46 : vector<8x128xf32>
    %49 = math.tanh %48 : vector<8x128xf32>
    %50 = vector.extract_strided_slice %49 {offsets = [0, 0], sizes = [8, 32], strides = [1, 1]} : vector<8x128xf32> to vector<8x32xf32>
    %cst_28 = arith.constant 1.000000e+00 : f32
    %51 = vector.broadcast %cst_28 : f32 to vector<8x32xf32>
    %52 = arith.addf %50, %51 : vector<8x32xf32>
    %cst_29 = arith.constant 5.000000e-01 : f32
    %53 = vector.broadcast %cst_29 : f32 to vector<8x32xf32>
    %54 = arith.mulf %53, %52 : vector<8x32xf32>
    %55 = vector.extract_strided_slice %49 {offsets = [0, 32], sizes = [8, 32], strides = [1, 1]} : vector<8x128xf32> to vector<8x32xf32>
    %cst_30 = arith.constant 1.000000e+00 : f32
    %56 = vector.broadcast %cst_30 : f32 to vector<8x32xf32>
    %57 = arith.addf %55, %56 : vector<8x32xf32>
    %cst_31 = arith.constant 5.000000e-01 : f32
    %58 = vector.broadcast %cst_31 : f32 to vector<8x32xf32>
    %59 = arith.mulf %58, %57 : vector<8x32xf32>
    %60 = vector.extract_strided_slice %49 {offsets = [0, 96], sizes = [8, 32], strides = [1, 1]} : vector<8x128xf32> to vector<8x32xf32>
    %cst_32 = arith.constant 1.000000e+00 : f32
    %61 = vector.broadcast %cst_32 : f32 to vector<8x32xf32>
    %62 = arith.addf %60, %61 : vector<8x32xf32>
    %cst_33 = arith.constant 5.000000e-01 : f32
    %63 = vector.broadcast %cst_33 : f32 to vector<8x32xf32>
    %64 = arith.mulf %63, %62 : vector<8x32xf32>
    %65 = vector.extract_strided_slice %46 {offsets = [0, 64], sizes = [8, 32], strides = [1, 1]} : vector<8x128xf32> to vector<8x32xf32>
    %66 = math.tanh %65 : vector<8x32xf32>
    %67 = arith.mulf %59, %41 : vector<8x32xf32>
    %68 = arith.mulf %54, %66 : vector<8x32xf32>
    %69 = arith.addf %67, %68 : vector<8x32xf32>
    %70 = math.tanh %69 : vector<8x32xf32>
    %71 = arith.mulf %64, %70 : vector<8x32xf32>
    %72 = vector.extract_strided_slice %7 {offsets = [16, 0], sizes = [8, 128], strides = [1, 1]} : vector<64x128xf32> to vector<8x128xf32>
    %cst_34 = arith.constant dense<0.000000e+00> : vector<8x128xf32>
    %73 = tpu.matmul %71, %0, %cst_34 {dimension_numbers = #tpu.dot_dimension_numbers<[1], [0], [0], [1], [0, 0, 1, 1], [], []>} : vector<8x32xf32>, vector<32x128xf32>, vector<8x128xf32> -> vector<8x128xf32>
    %74 = arith.addf %72, %73 : vector<8x128xf32>
    %cst_35 = arith.constant 5.000000e-01 : f32
    %75 = vector.broadcast %cst_35 : f32 to vector<8x128xf32>
    %76 = arith.mulf %75, %74 : vector<8x128xf32>
    %77 = math.tanh %76 : vector<8x128xf32>
    %78 = vector.extract_strided_slice %77 {offsets = [0, 0], sizes = [8, 32], strides = [1, 1]} : vector<8x128xf32> to vector<8x32xf32>
    %cst_36 = arith.constant 1.000000e+00 : f32
    %79 = vector.broadcast %cst_36 : f32 to vector<8x32xf32>
    %80 = arith.addf %78, %79 : vector<8x32xf32>
    %cst_37 = arith.constant 5.000000e-01 : f32
    %81 = vector.broadcast %cst_37 : f32 to vector<8x32xf32>
    %82 = arith.mulf %81, %80 : vector<8x32xf32>
    %83 = vector.extract_strided_slice %77 {offsets = [0, 32], sizes = [8, 32], strides = [1, 1]} : vector<8x128xf32> to vector<8x32xf32>
    %cst_38 = arith.constant 1.000000e+00 : f32
    %84 = vector.broadcast %cst_38 : f32 to vector<8x32xf32>
    %85 = arith.addf %83, %84 : vector<8x32xf32>
    %cst_39 = arith.constant 5.000000e-01 : f32
    %86 = vector.broadcast %cst_39 : f32 to vector<8x32xf32>
    %87 = arith.mulf %86, %85 : vector<8x32xf32>
    %88 = vector.extract_strided_slice %77 {offsets = [0, 96], sizes = [8, 32], strides = [1, 1]} : vector<8x128xf32> to vector<8x32xf32>
    %cst_40 = arith.constant 1.000000e+00 : f32
    %89 = vector.broadcast %cst_40 : f32 to vector<8x32xf32>
    %90 = arith.addf %88, %89 : vector<8x32xf32>
    %cst_41 = arith.constant 5.000000e-01 : f32
    %91 = vector.broadcast %cst_41 : f32 to vector<8x32xf32>
    %92 = arith.mulf %91, %90 : vector<8x32xf32>
    %93 = vector.extract_strided_slice %74 {offsets = [0, 64], sizes = [8, 32], strides = [1, 1]} : vector<8x128xf32> to vector<8x32xf32>
    %94 = math.tanh %93 : vector<8x32xf32>
    %95 = arith.mulf %87, %69 : vector<8x32xf32>
    %96 = arith.mulf %82, %94 : vector<8x32xf32>
    %97 = arith.addf %95, %96 : vector<8x32xf32>
    %98 = math.tanh %97 : vector<8x32xf32>
    %99 = arith.mulf %92, %98 : vector<8x32xf32>
    %100 = vector.extract_strided_slice %7 {offsets = [24, 0], sizes = [8, 128], strides = [1, 1]} : vector<64x128xf32> to vector<8x128xf32>
    %cst_42 = arith.constant dense<0.000000e+00> : vector<8x128xf32>
    %101 = tpu.matmul %99, %0, %cst_42 {dimension_numbers = #tpu.dot_dimension_numbers<[1], [0], [0], [1], [0, 0, 1, 1], [], []>} : vector<8x32xf32>, vector<32x128xf32>, vector<8x128xf32> -> vector<8x128xf32>
    %102 = arith.addf %100, %101 : vector<8x128xf32>
    %cst_43 = arith.constant 5.000000e-01 : f32
    %103 = vector.broadcast %cst_43 : f32 to vector<8x128xf32>
    %104 = arith.mulf %103, %102 : vector<8x128xf32>
    %105 = math.tanh %104 : vector<8x128xf32>
    %106 = vector.extract_strided_slice %105 {offsets = [0, 0], sizes = [8, 32], strides = [1, 1]} : vector<8x128xf32> to vector<8x32xf32>
    %cst_44 = arith.constant 1.000000e+00 : f32
    %107 = vector.broadcast %cst_44 : f32 to vector<8x32xf32>
    %108 = arith.addf %106, %107 : vector<8x32xf32>
    %cst_45 = arith.constant 5.000000e-01 : f32
    %109 = vector.broadcast %cst_45 : f32 to vector<8x32xf32>
    %110 = arith.mulf %109, %108 : vector<8x32xf32>
    %111 = vector.extract_strided_slice %105 {offsets = [0, 32], sizes = [8, 32], strides = [1, 1]} : vector<8x128xf32> to vector<8x32xf32>
    %cst_46 = arith.constant 1.000000e+00 : f32
    %112 = vector.broadcast %cst_46 : f32 to vector<8x32xf32>
    %113 = arith.addf %111, %112 : vector<8x32xf32>
    %cst_47 = arith.constant 5.000000e-01 : f32
    %114 = vector.broadcast %cst_47 : f32 to vector<8x32xf32>
    %115 = arith.mulf %114, %113 : vector<8x32xf32>
    %116 = vector.extract_strided_slice %105 {offsets = [0, 96], sizes = [8, 32], strides = [1, 1]} : vector<8x128xf32> to vector<8x32xf32>
    %cst_48 = arith.constant 1.000000e+00 : f32
    %117 = vector.broadcast %cst_48 : f32 to vector<8x32xf32>
    %118 = arith.addf %116, %117 : vector<8x32xf32>
    %cst_49 = arith.constant 5.000000e-01 : f32
    %119 = vector.broadcast %cst_49 : f32 to vector<8x32xf32>
    %120 = arith.mulf %119, %118 : vector<8x32xf32>
    %121 = vector.extract_strided_slice %102 {offsets = [0, 64], sizes = [8, 32], strides = [1, 1]} : vector<8x128xf32> to vector<8x32xf32>
    %122 = math.tanh %121 : vector<8x32xf32>
    %123 = arith.mulf %115, %97 : vector<8x32xf32>
    %124 = arith.mulf %110, %122 : vector<8x32xf32>
    %125 = arith.addf %123, %124 : vector<8x32xf32>
    %126 = math.tanh %125 : vector<8x32xf32>
    %127 = arith.mulf %120, %126 : vector<8x32xf32>
    %128 = vector.extract_strided_slice %7 {offsets = [32, 0], sizes = [8, 128], strides = [1, 1]} : vector<64x128xf32> to vector<8x128xf32>
    %cst_50 = arith.constant dense<0.000000e+00> : vector<8x128xf32>
    %129 = tpu.matmul %127, %0, %cst_50 {dimension_numbers = #tpu.dot_dimension_numbers<[1], [0], [0], [1], [0, 0, 1, 1], [], []>} : vector<8x32xf32>, vector<32x128xf32>, vector<8x128xf32> -> vector<8x128xf32>
    %130 = arith.addf %128, %129 : vector<8x128xf32>
    %cst_51 = arith.constant 5.000000e-01 : f32
    %131 = vector.broadcast %cst_51 : f32 to vector<8x128xf32>
    %132 = arith.mulf %131, %130 : vector<8x128xf32>
    %133 = math.tanh %132 : vector<8x128xf32>
    %134 = vector.extract_strided_slice %133 {offsets = [0, 0], sizes = [8, 32], strides = [1, 1]} : vector<8x128xf32> to vector<8x32xf32>
    %cst_52 = arith.constant 1.000000e+00 : f32
    %135 = vector.broadcast %cst_52 : f32 to vector<8x32xf32>
    %136 = arith.addf %134, %135 : vector<8x32xf32>
    %cst_53 = arith.constant 5.000000e-01 : f32
    %137 = vector.broadcast %cst_53 : f32 to vector<8x32xf32>
    %138 = arith.mulf %137, %136 : vector<8x32xf32>
    %139 = vector.extract_strided_slice %133 {offsets = [0, 32], sizes = [8, 32], strides = [1, 1]} : vector<8x128xf32> to vector<8x32xf32>
    %cst_54 = arith.constant 1.000000e+00 : f32
    %140 = vector.broadcast %cst_54 : f32 to vector<8x32xf32>
    %141 = arith.addf %139, %140 : vector<8x32xf32>
    %cst_55 = arith.constant 5.000000e-01 : f32
    %142 = vector.broadcast %cst_55 : f32 to vector<8x32xf32>
    %143 = arith.mulf %142, %141 : vector<8x32xf32>
    %144 = vector.extract_strided_slice %133 {offsets = [0, 96], sizes = [8, 32], strides = [1, 1]} : vector<8x128xf32> to vector<8x32xf32>
    %cst_56 = arith.constant 1.000000e+00 : f32
    %145 = vector.broadcast %cst_56 : f32 to vector<8x32xf32>
    %146 = arith.addf %144, %145 : vector<8x32xf32>
    %cst_57 = arith.constant 5.000000e-01 : f32
    %147 = vector.broadcast %cst_57 : f32 to vector<8x32xf32>
    %148 = arith.mulf %147, %146 : vector<8x32xf32>
    %149 = vector.extract_strided_slice %130 {offsets = [0, 64], sizes = [8, 32], strides = [1, 1]} : vector<8x128xf32> to vector<8x32xf32>
    %150 = math.tanh %149 : vector<8x32xf32>
    %151 = arith.mulf %143, %125 : vector<8x32xf32>
    %152 = arith.mulf %138, %150 : vector<8x32xf32>
    %153 = arith.addf %151, %152 : vector<8x32xf32>
    %154 = math.tanh %153 : vector<8x32xf32>
    %155 = arith.mulf %148, %154 : vector<8x32xf32>
    %156 = vector.extract_strided_slice %7 {offsets = [40, 0], sizes = [8, 128], strides = [1, 1]} : vector<64x128xf32> to vector<8x128xf32>
    %cst_58 = arith.constant dense<0.000000e+00> : vector<8x128xf32>
    %157 = tpu.matmul %155, %0, %cst_58 {dimension_numbers = #tpu.dot_dimension_numbers<[1], [0], [0], [1], [0, 0, 1, 1], [], []>} : vector<8x32xf32>, vector<32x128xf32>, vector<8x128xf32> -> vector<8x128xf32>
    %158 = arith.addf %156, %157 : vector<8x128xf32>
    %cst_59 = arith.constant 5.000000e-01 : f32
    %159 = vector.broadcast %cst_59 : f32 to vector<8x128xf32>
    %160 = arith.mulf %159, %158 : vector<8x128xf32>
    %161 = math.tanh %160 : vector<8x128xf32>
    %162 = vector.extract_strided_slice %161 {offsets = [0, 0], sizes = [8, 32], strides = [1, 1]} : vector<8x128xf32> to vector<8x32xf32>
    %cst_60 = arith.constant 1.000000e+00 : f32
    %163 = vector.broadcast %cst_60 : f32 to vector<8x32xf32>
    %164 = arith.addf %162, %163 : vector<8x32xf32>
    %cst_61 = arith.constant 5.000000e-01 : f32
    %165 = vector.broadcast %cst_61 : f32 to vector<8x32xf32>
    %166 = arith.mulf %165, %164 : vector<8x32xf32>
    %167 = vector.extract_strided_slice %161 {offsets = [0, 32], sizes = [8, 32], strides = [1, 1]} : vector<8x128xf32> to vector<8x32xf32>
    %cst_62 = arith.constant 1.000000e+00 : f32
    %168 = vector.broadcast %cst_62 : f32 to vector<8x32xf32>
    %169 = arith.addf %167, %168 : vector<8x32xf32>
    %cst_63 = arith.constant 5.000000e-01 : f32
    %170 = vector.broadcast %cst_63 : f32 to vector<8x32xf32>
    %171 = arith.mulf %170, %169 : vector<8x32xf32>
    %172 = vector.extract_strided_slice %161 {offsets = [0, 96], sizes = [8, 32], strides = [1, 1]} : vector<8x128xf32> to vector<8x32xf32>
    %cst_64 = arith.constant 1.000000e+00 : f32
    %173 = vector.broadcast %cst_64 : f32 to vector<8x32xf32>
    %174 = arith.addf %172, %173 : vector<8x32xf32>
    %cst_65 = arith.constant 5.000000e-01 : f32
    %175 = vector.broadcast %cst_65 : f32 to vector<8x32xf32>
    %176 = arith.mulf %175, %174 : vector<8x32xf32>
    %177 = vector.extract_strided_slice %158 {offsets = [0, 64], sizes = [8, 32], strides = [1, 1]} : vector<8x128xf32> to vector<8x32xf32>
    %178 = math.tanh %177 : vector<8x32xf32>
    %179 = arith.mulf %171, %153 : vector<8x32xf32>
    %180 = arith.mulf %166, %178 : vector<8x32xf32>
    %181 = arith.addf %179, %180 : vector<8x32xf32>
    %182 = math.tanh %181 : vector<8x32xf32>
    %183 = arith.mulf %176, %182 : vector<8x32xf32>
    %184 = vector.extract_strided_slice %7 {offsets = [48, 0], sizes = [8, 128], strides = [1, 1]} : vector<64x128xf32> to vector<8x128xf32>
    %cst_66 = arith.constant dense<0.000000e+00> : vector<8x128xf32>
    %185 = tpu.matmul %183, %0, %cst_66 {dimension_numbers = #tpu.dot_dimension_numbers<[1], [0], [0], [1], [0, 0, 1, 1], [], []>} : vector<8x32xf32>, vector<32x128xf32>, vector<8x128xf32> -> vector<8x128xf32>
    %186 = arith.addf %184, %185 : vector<8x128xf32>
    %cst_67 = arith.constant 5.000000e-01 : f32
    %187 = vector.broadcast %cst_67 : f32 to vector<8x128xf32>
    %188 = arith.mulf %187, %186 : vector<8x128xf32>
    %189 = math.tanh %188 : vector<8x128xf32>
    %190 = vector.extract_strided_slice %189 {offsets = [0, 0], sizes = [8, 32], strides = [1, 1]} : vector<8x128xf32> to vector<8x32xf32>
    %cst_68 = arith.constant 1.000000e+00 : f32
    %191 = vector.broadcast %cst_68 : f32 to vector<8x32xf32>
    %192 = arith.addf %190, %191 : vector<8x32xf32>
    %cst_69 = arith.constant 5.000000e-01 : f32
    %193 = vector.broadcast %cst_69 : f32 to vector<8x32xf32>
    %194 = arith.mulf %193, %192 : vector<8x32xf32>
    %195 = vector.extract_strided_slice %189 {offsets = [0, 32], sizes = [8, 32], strides = [1, 1]} : vector<8x128xf32> to vector<8x32xf32>
    %cst_70 = arith.constant 1.000000e+00 : f32
    %196 = vector.broadcast %cst_70 : f32 to vector<8x32xf32>
    %197 = arith.addf %195, %196 : vector<8x32xf32>
    %cst_71 = arith.constant 5.000000e-01 : f32
    %198 = vector.broadcast %cst_71 : f32 to vector<8x32xf32>
    %199 = arith.mulf %198, %197 : vector<8x32xf32>
    %200 = vector.extract_strided_slice %189 {offsets = [0, 96], sizes = [8, 32], strides = [1, 1]} : vector<8x128xf32> to vector<8x32xf32>
    %cst_72 = arith.constant 1.000000e+00 : f32
    %201 = vector.broadcast %cst_72 : f32 to vector<8x32xf32>
    %202 = arith.addf %200, %201 : vector<8x32xf32>
    %cst_73 = arith.constant 5.000000e-01 : f32
    %203 = vector.broadcast %cst_73 : f32 to vector<8x32xf32>
    %204 = arith.mulf %203, %202 : vector<8x32xf32>
    %205 = vector.extract_strided_slice %186 {offsets = [0, 64], sizes = [8, 32], strides = [1, 1]} : vector<8x128xf32> to vector<8x32xf32>
    %206 = math.tanh %205 : vector<8x32xf32>
    %207 = arith.mulf %199, %181 : vector<8x32xf32>
    %208 = arith.mulf %194, %206 : vector<8x32xf32>
    %209 = arith.addf %207, %208 : vector<8x32xf32>
    %210 = math.tanh %209 : vector<8x32xf32>
    %211 = arith.mulf %204, %210 : vector<8x32xf32>
    %212 = vector.extract_strided_slice %7 {offsets = [56, 0], sizes = [8, 128], strides = [1, 1]} : vector<64x128xf32> to vector<8x128xf32>
    %cst_74 = arith.constant dense<0.000000e+00> : vector<8x128xf32>
    %213 = tpu.matmul %211, %0, %cst_74 {dimension_numbers = #tpu.dot_dimension_numbers<[1], [0], [0], [1], [0, 0, 1, 1], [], []>} : vector<8x32xf32>, vector<32x128xf32>, vector<8x128xf32> -> vector<8x128xf32>
    %214 = arith.addf %212, %213 : vector<8x128xf32>
    %cst_75 = arith.constant 5.000000e-01 : f32
    %215 = vector.broadcast %cst_75 : f32 to vector<8x128xf32>
    %216 = arith.mulf %215, %214 : vector<8x128xf32>
    %217 = math.tanh %216 : vector<8x128xf32>
    %218 = vector.extract_strided_slice %217 {offsets = [0, 0], sizes = [8, 32], strides = [1, 1]} : vector<8x128xf32> to vector<8x32xf32>
    %cst_76 = arith.constant 1.000000e+00 : f32
    %219 = vector.broadcast %cst_76 : f32 to vector<8x32xf32>
    %220 = arith.addf %218, %219 : vector<8x32xf32>
    %cst_77 = arith.constant 5.000000e-01 : f32
    %221 = vector.broadcast %cst_77 : f32 to vector<8x32xf32>
    %222 = arith.mulf %221, %220 : vector<8x32xf32>
    %223 = vector.extract_strided_slice %217 {offsets = [0, 32], sizes = [8, 32], strides = [1, 1]} : vector<8x128xf32> to vector<8x32xf32>
    %cst_78 = arith.constant 1.000000e+00 : f32
    %224 = vector.broadcast %cst_78 : f32 to vector<8x32xf32>
    %225 = arith.addf %223, %224 : vector<8x32xf32>
    %cst_79 = arith.constant 5.000000e-01 : f32
    %226 = vector.broadcast %cst_79 : f32 to vector<8x32xf32>
    %227 = arith.mulf %226, %225 : vector<8x32xf32>
    %228 = vector.extract_strided_slice %217 {offsets = [0, 96], sizes = [8, 32], strides = [1, 1]} : vector<8x128xf32> to vector<8x32xf32>
    %cst_80 = arith.constant 1.000000e+00 : f32
    %229 = vector.broadcast %cst_80 : f32 to vector<8x32xf32>
    %230 = arith.addf %228, %229 : vector<8x32xf32>
    %cst_81 = arith.constant 5.000000e-01 : f32
    %231 = vector.broadcast %cst_81 : f32 to vector<8x32xf32>
    %232 = arith.mulf %231, %230 : vector<8x32xf32>
    %233 = vector.extract_strided_slice %214 {offsets = [0, 64], sizes = [8, 32], strides = [1, 1]} : vector<8x128xf32> to vector<8x32xf32>
    %234 = math.tanh %233 : vector<8x32xf32>
    %235 = arith.mulf %227, %209 : vector<8x32xf32>
    %236 = arith.mulf %222, %234 : vector<8x32xf32>
    %237 = arith.addf %235, %236 : vector<8x32xf32>
    %238 = math.tanh %237 : vector<8x32xf32>
    %239 = arith.mulf %232, %238 : vector<8x32xf32>
    %240 = vector.extract_strided_slice %13 {offsets = [0, 0], sizes = [8, 128], strides = [1, 1]} : vector<64x128xf32> to vector<8x128xf32>
    %cst_82 = arith.constant dense<0.000000e+00> : vector<8x128xf32>
    %241 = tpu.matmul %239, %1, %cst_82 {dimension_numbers = #tpu.dot_dimension_numbers<[1], [0], [0], [1], [0, 0, 1, 1], [], []>} : vector<8x32xf32>, vector<32x128xf32>, vector<8x128xf32> -> vector<8x128xf32>
    %242 = arith.addf %240, %241 : vector<8x128xf32>
    %cst_83 = arith.constant 5.000000e-01 : f32
    %243 = vector.broadcast %cst_83 : f32 to vector<8x128xf32>
    %244 = arith.mulf %243, %242 : vector<8x128xf32>
    %245 = math.tanh %244 : vector<8x128xf32>
    %246 = vector.extract_strided_slice %245 {offsets = [0, 0], sizes = [8, 32], strides = [1, 1]} : vector<8x128xf32> to vector<8x32xf32>
    %cst_84 = arith.constant 1.000000e+00 : f32
    %247 = vector.broadcast %cst_84 : f32 to vector<8x32xf32>
    %248 = arith.addf %246, %247 : vector<8x32xf32>
    %cst_85 = arith.constant 5.000000e-01 : f32
    %249 = vector.broadcast %cst_85 : f32 to vector<8x32xf32>
    %250 = arith.mulf %249, %248 : vector<8x32xf32>
    %251 = vector.extract_strided_slice %245 {offsets = [0, 32], sizes = [8, 32], strides = [1, 1]} : vector<8x128xf32> to vector<8x32xf32>
    %cst_86 = arith.constant 1.000000e+00 : f32
    %252 = vector.broadcast %cst_86 : f32 to vector<8x32xf32>
    %253 = arith.addf %251, %252 : vector<8x32xf32>
    %cst_87 = arith.constant 5.000000e-01 : f32
    %254 = vector.broadcast %cst_87 : f32 to vector<8x32xf32>
    %255 = arith.mulf %254, %253 : vector<8x32xf32>
    %256 = vector.extract_strided_slice %245 {offsets = [0, 96], sizes = [8, 32], strides = [1, 1]} : vector<8x128xf32> to vector<8x32xf32>
    %cst_88 = arith.constant 1.000000e+00 : f32
    %257 = vector.broadcast %cst_88 : f32 to vector<8x32xf32>
    %258 = arith.addf %256, %257 : vector<8x32xf32>
    %cst_89 = arith.constant 5.000000e-01 : f32
    %259 = vector.broadcast %cst_89 : f32 to vector<8x32xf32>
    %260 = arith.mulf %259, %258 : vector<8x32xf32>
    %261 = vector.extract_strided_slice %242 {offsets = [0, 64], sizes = [8, 32], strides = [1, 1]} : vector<8x128xf32> to vector<8x32xf32>
    %262 = math.tanh %261 : vector<8x32xf32>
    %263 = arith.mulf %255, %237 : vector<8x32xf32>
    %264 = arith.mulf %250, %262 : vector<8x32xf32>
    %265 = arith.addf %263, %264 : vector<8x32xf32>
    %266 = math.tanh %265 : vector<8x32xf32>
    %267 = arith.mulf %260, %266 : vector<8x32xf32>
    %268 = vector.extract_strided_slice %13 {offsets = [8, 0], sizes = [8, 128], strides = [1, 1]} : vector<64x128xf32> to vector<8x128xf32>
    %cst_90 = arith.constant dense<0.000000e+00> : vector<8x128xf32>
    %269 = tpu.matmul %267, %1, %cst_90 {dimension_numbers = #tpu.dot_dimension_numbers<[1], [0], [0], [1], [0, 0, 1, 1], [], []>} : vector<8x32xf32>, vector<32x128xf32>, vector<8x128xf32> -> vector<8x128xf32>
    %270 = arith.addf %268, %269 : vector<8x128xf32>
    %cst_91 = arith.constant 5.000000e-01 : f32
    %271 = vector.broadcast %cst_91 : f32 to vector<8x128xf32>
    %272 = arith.mulf %271, %270 : vector<8x128xf32>
    %273 = math.tanh %272 : vector<8x128xf32>
    %274 = vector.extract_strided_slice %273 {offsets = [0, 0], sizes = [8, 32], strides = [1, 1]} : vector<8x128xf32> to vector<8x32xf32>
    %cst_92 = arith.constant 1.000000e+00 : f32
    %275 = vector.broadcast %cst_92 : f32 to vector<8x32xf32>
    %276 = arith.addf %274, %275 : vector<8x32xf32>
    %cst_93 = arith.constant 5.000000e-01 : f32
    %277 = vector.broadcast %cst_93 : f32 to vector<8x32xf32>
    %278 = arith.mulf %277, %276 : vector<8x32xf32>
    %279 = vector.extract_strided_slice %273 {offsets = [0, 32], sizes = [8, 32], strides = [1, 1]} : vector<8x128xf32> to vector<8x32xf32>
    %cst_94 = arith.constant 1.000000e+00 : f32
    %280 = vector.broadcast %cst_94 : f32 to vector<8x32xf32>
    %281 = arith.addf %279, %280 : vector<8x32xf32>
    %cst_95 = arith.constant 5.000000e-01 : f32
    %282 = vector.broadcast %cst_95 : f32 to vector<8x32xf32>
    %283 = arith.mulf %282, %281 : vector<8x32xf32>
    %284 = vector.extract_strided_slice %273 {offsets = [0, 96], sizes = [8, 32], strides = [1, 1]} : vector<8x128xf32> to vector<8x32xf32>
    %cst_96 = arith.constant 1.000000e+00 : f32
    %285 = vector.broadcast %cst_96 : f32 to vector<8x32xf32>
    %286 = arith.addf %284, %285 : vector<8x32xf32>
    %cst_97 = arith.constant 5.000000e-01 : f32
    %287 = vector.broadcast %cst_97 : f32 to vector<8x32xf32>
    %288 = arith.mulf %287, %286 : vector<8x32xf32>
    %289 = vector.extract_strided_slice %270 {offsets = [0, 64], sizes = [8, 32], strides = [1, 1]} : vector<8x128xf32> to vector<8x32xf32>
    %290 = math.tanh %289 : vector<8x32xf32>
    %291 = arith.mulf %283, %265 : vector<8x32xf32>
    %292 = arith.mulf %278, %290 : vector<8x32xf32>
    %293 = arith.addf %291, %292 : vector<8x32xf32>
    %294 = math.tanh %293 : vector<8x32xf32>
    %295 = arith.mulf %288, %294 : vector<8x32xf32>
    %296 = vector.extract_strided_slice %13 {offsets = [16, 0], sizes = [8, 128], strides = [1, 1]} : vector<64x128xf32> to vector<8x128xf32>
    %cst_98 = arith.constant dense<0.000000e+00> : vector<8x128xf32>
    %297 = tpu.matmul %295, %1, %cst_98 {dimension_numbers = #tpu.dot_dimension_numbers<[1], [0], [0], [1], [0, 0, 1, 1], [], []>} : vector<8x32xf32>, vector<32x128xf32>, vector<8x128xf32> -> vector<8x128xf32>
    %298 = arith.addf %296, %297 : vector<8x128xf32>
    %cst_99 = arith.constant 5.000000e-01 : f32
    %299 = vector.broadcast %cst_99 : f32 to vector<8x128xf32>
    %300 = arith.mulf %299, %298 : vector<8x128xf32>
    %301 = math.tanh %300 : vector<8x128xf32>
    %302 = vector.extract_strided_slice %301 {offsets = [0, 0], sizes = [8, 32], strides = [1, 1]} : vector<8x128xf32> to vector<8x32xf32>
    %cst_100 = arith.constant 1.000000e+00 : f32
    %303 = vector.broadcast %cst_100 : f32 to vector<8x32xf32>
    %304 = arith.addf %302, %303 : vector<8x32xf32>
    %cst_101 = arith.constant 5.000000e-01 : f32
    %305 = vector.broadcast %cst_101 : f32 to vector<8x32xf32>
    %306 = arith.mulf %305, %304 : vector<8x32xf32>
    %307 = vector.extract_strided_slice %301 {offsets = [0, 32], sizes = [8, 32], strides = [1, 1]} : vector<8x128xf32> to vector<8x32xf32>
    %cst_102 = arith.constant 1.000000e+00 : f32
    %308 = vector.broadcast %cst_102 : f32 to vector<8x32xf32>
    %309 = arith.addf %307, %308 : vector<8x32xf32>
    %cst_103 = arith.constant 5.000000e-01 : f32
    %310 = vector.broadcast %cst_103 : f32 to vector<8x32xf32>
    %311 = arith.mulf %310, %309 : vector<8x32xf32>
    %312 = vector.extract_strided_slice %301 {offsets = [0, 96], sizes = [8, 32], strides = [1, 1]} : vector<8x128xf32> to vector<8x32xf32>
    %cst_104 = arith.constant 1.000000e+00 : f32
    %313 = vector.broadcast %cst_104 : f32 to vector<8x32xf32>
    %314 = arith.addf %312, %313 : vector<8x32xf32>
    %cst_105 = arith.constant 5.000000e-01 : f32
    %315 = vector.broadcast %cst_105 : f32 to vector<8x32xf32>
    %316 = arith.mulf %315, %314 : vector<8x32xf32>
    %317 = vector.extract_strided_slice %298 {offsets = [0, 64], sizes = [8, 32], strides = [1, 1]} : vector<8x128xf32> to vector<8x32xf32>
    %318 = math.tanh %317 : vector<8x32xf32>
    %319 = arith.mulf %311, %293 : vector<8x32xf32>
    %320 = arith.mulf %306, %318 : vector<8x32xf32>
    %321 = arith.addf %319, %320 : vector<8x32xf32>
    %322 = math.tanh %321 : vector<8x32xf32>
    %323 = arith.mulf %316, %322 : vector<8x32xf32>
    %324 = vector.extract_strided_slice %13 {offsets = [24, 0], sizes = [8, 128], strides = [1, 1]} : vector<64x128xf32> to vector<8x128xf32>
    %cst_106 = arith.constant dense<0.000000e+00> : vector<8x128xf32>
    %325 = tpu.matmul %323, %1, %cst_106 {dimension_numbers = #tpu.dot_dimension_numbers<[1], [0], [0], [1], [0, 0, 1, 1], [], []>} : vector<8x32xf32>, vector<32x128xf32>, vector<8x128xf32> -> vector<8x128xf32>
    %326 = arith.addf %324, %325 : vector<8x128xf32>
    %cst_107 = arith.constant 5.000000e-01 : f32
    %327 = vector.broadcast %cst_107 : f32 to vector<8x128xf32>
    %328 = arith.mulf %327, %326 : vector<8x128xf32>
    %329 = math.tanh %328 : vector<8x128xf32>
    %330 = vector.extract_strided_slice %329 {offsets = [0, 0], sizes = [8, 32], strides = [1, 1]} : vector<8x128xf32> to vector<8x32xf32>
    %cst_108 = arith.constant 1.000000e+00 : f32
    %331 = vector.broadcast %cst_108 : f32 to vector<8x32xf32>
    %332 = arith.addf %330, %331 : vector<8x32xf32>
    %cst_109 = arith.constant 5.000000e-01 : f32
    %333 = vector.broadcast %cst_109 : f32 to vector<8x32xf32>
    %334 = arith.mulf %333, %332 : vector<8x32xf32>
    %335 = vector.extract_strided_slice %329 {offsets = [0, 32], sizes = [8, 32], strides = [1, 1]} : vector<8x128xf32> to vector<8x32xf32>
    %cst_110 = arith.constant 1.000000e+00 : f32
    %336 = vector.broadcast %cst_110 : f32 to vector<8x32xf32>
    %337 = arith.addf %335, %336 : vector<8x32xf32>
    %cst_111 = arith.constant 5.000000e-01 : f32
    %338 = vector.broadcast %cst_111 : f32 to vector<8x32xf32>
    %339 = arith.mulf %338, %337 : vector<8x32xf32>
    %340 = vector.extract_strided_slice %329 {offsets = [0, 96], sizes = [8, 32], strides = [1, 1]} : vector<8x128xf32> to vector<8x32xf32>
    %cst_112 = arith.constant 1.000000e+00 : f32
    %341 = vector.broadcast %cst_112 : f32 to vector<8x32xf32>
    %342 = arith.addf %340, %341 : vector<8x32xf32>
    %cst_113 = arith.constant 5.000000e-01 : f32
    %343 = vector.broadcast %cst_113 : f32 to vector<8x32xf32>
    %344 = arith.mulf %343, %342 : vector<8x32xf32>
    %345 = vector.extract_strided_slice %326 {offsets = [0, 64], sizes = [8, 32], strides = [1, 1]} : vector<8x128xf32> to vector<8x32xf32>
    %346 = math.tanh %345 : vector<8x32xf32>
    %347 = arith.mulf %339, %321 : vector<8x32xf32>
    %348 = arith.mulf %334, %346 : vector<8x32xf32>
    %349 = arith.addf %347, %348 : vector<8x32xf32>
    %350 = math.tanh %349 : vector<8x32xf32>
    %351 = arith.mulf %344, %350 : vector<8x32xf32>
    %352 = vector.extract_strided_slice %13 {offsets = [32, 0], sizes = [8, 128], strides = [1, 1]} : vector<64x128xf32> to vector<8x128xf32>
    %cst_114 = arith.constant dense<0.000000e+00> : vector<8x128xf32>
    %353 = tpu.matmul %351, %1, %cst_114 {dimension_numbers = #tpu.dot_dimension_numbers<[1], [0], [0], [1], [0, 0, 1, 1], [], []>} : vector<8x32xf32>, vector<32x128xf32>, vector<8x128xf32> -> vector<8x128xf32>
    %354 = arith.addf %352, %353 : vector<8x128xf32>
    %cst_115 = arith.constant 5.000000e-01 : f32
    %355 = vector.broadcast %cst_115 : f32 to vector<8x128xf32>
    %356 = arith.mulf %355, %354 : vector<8x128xf32>
    %357 = math.tanh %356 : vector<8x128xf32>
    %358 = vector.extract_strided_slice %357 {offsets = [0, 0], sizes = [8, 32], strides = [1, 1]} : vector<8x128xf32> to vector<8x32xf32>
    %cst_116 = arith.constant 1.000000e+00 : f32
    %359 = vector.broadcast %cst_116 : f32 to vector<8x32xf32>
    %360 = arith.addf %358, %359 : vector<8x32xf32>
    %cst_117 = arith.constant 5.000000e-01 : f32
    %361 = vector.broadcast %cst_117 : f32 to vector<8x32xf32>
    %362 = arith.mulf %361, %360 : vector<8x32xf32>
    %363 = vector.extract_strided_slice %357 {offsets = [0, 32], sizes = [8, 32], strides = [1, 1]} : vector<8x128xf32> to vector<8x32xf32>
    %cst_118 = arith.constant 1.000000e+00 : f32
    %364 = vector.broadcast %cst_118 : f32 to vector<8x32xf32>
    %365 = arith.addf %363, %364 : vector<8x32xf32>
    %cst_119 = arith.constant 5.000000e-01 : f32
    %366 = vector.broadcast %cst_119 : f32 to vector<8x32xf32>
    %367 = arith.mulf %366, %365 : vector<8x32xf32>
    %368 = vector.extract_strided_slice %357 {offsets = [0, 96], sizes = [8, 32], strides = [1, 1]} : vector<8x128xf32> to vector<8x32xf32>
    %cst_120 = arith.constant 1.000000e+00 : f32
    %369 = vector.broadcast %cst_120 : f32 to vector<8x32xf32>
    %370 = arith.addf %368, %369 : vector<8x32xf32>
    %cst_121 = arith.constant 5.000000e-01 : f32
    %371 = vector.broadcast %cst_121 : f32 to vector<8x32xf32>
    %372 = arith.mulf %371, %370 : vector<8x32xf32>
    %373 = vector.extract_strided_slice %354 {offsets = [0, 64], sizes = [8, 32], strides = [1, 1]} : vector<8x128xf32> to vector<8x32xf32>
    %374 = math.tanh %373 : vector<8x32xf32>
    %375 = arith.mulf %367, %349 : vector<8x32xf32>
    %376 = arith.mulf %362, %374 : vector<8x32xf32>
    %377 = arith.addf %375, %376 : vector<8x32xf32>
    %378 = math.tanh %377 : vector<8x32xf32>
    %379 = arith.mulf %372, %378 : vector<8x32xf32>
    %380 = vector.extract_strided_slice %13 {offsets = [40, 0], sizes = [8, 128], strides = [1, 1]} : vector<64x128xf32> to vector<8x128xf32>
    %cst_122 = arith.constant dense<0.000000e+00> : vector<8x128xf32>
    %381 = tpu.matmul %379, %1, %cst_122 {dimension_numbers = #tpu.dot_dimension_numbers<[1], [0], [0], [1], [0, 0, 1, 1], [], []>} : vector<8x32xf32>, vector<32x128xf32>, vector<8x128xf32> -> vector<8x128xf32>
    %382 = arith.addf %380, %381 : vector<8x128xf32>
    %cst_123 = arith.constant 5.000000e-01 : f32
    %383 = vector.broadcast %cst_123 : f32 to vector<8x128xf32>
    %384 = arith.mulf %383, %382 : vector<8x128xf32>
    %385 = math.tanh %384 : vector<8x128xf32>
    %386 = vector.extract_strided_slice %385 {offsets = [0, 0], sizes = [8, 32], strides = [1, 1]} : vector<8x128xf32> to vector<8x32xf32>
    %cst_124 = arith.constant 1.000000e+00 : f32
    %387 = vector.broadcast %cst_124 : f32 to vector<8x32xf32>
    %388 = arith.addf %386, %387 : vector<8x32xf32>
    %cst_125 = arith.constant 5.000000e-01 : f32
    %389 = vector.broadcast %cst_125 : f32 to vector<8x32xf32>
    %390 = arith.mulf %389, %388 : vector<8x32xf32>
    %391 = vector.extract_strided_slice %385 {offsets = [0, 32], sizes = [8, 32], strides = [1, 1]} : vector<8x128xf32> to vector<8x32xf32>
    %cst_126 = arith.constant 1.000000e+00 : f32
    %392 = vector.broadcast %cst_126 : f32 to vector<8x32xf32>
    %393 = arith.addf %391, %392 : vector<8x32xf32>
    %cst_127 = arith.constant 5.000000e-01 : f32
    %394 = vector.broadcast %cst_127 : f32 to vector<8x32xf32>
    %395 = arith.mulf %394, %393 : vector<8x32xf32>
    %396 = vector.extract_strided_slice %385 {offsets = [0, 96], sizes = [8, 32], strides = [1, 1]} : vector<8x128xf32> to vector<8x32xf32>
    %cst_128 = arith.constant 1.000000e+00 : f32
    %397 = vector.broadcast %cst_128 : f32 to vector<8x32xf32>
    %398 = arith.addf %396, %397 : vector<8x32xf32>
    %cst_129 = arith.constant 5.000000e-01 : f32
    %399 = vector.broadcast %cst_129 : f32 to vector<8x32xf32>
    %400 = arith.mulf %399, %398 : vector<8x32xf32>
    %401 = vector.extract_strided_slice %382 {offsets = [0, 64], sizes = [8, 32], strides = [1, 1]} : vector<8x128xf32> to vector<8x32xf32>
    %402 = math.tanh %401 : vector<8x32xf32>
    %403 = arith.mulf %395, %377 : vector<8x32xf32>
    %404 = arith.mulf %390, %402 : vector<8x32xf32>
    %405 = arith.addf %403, %404 : vector<8x32xf32>
    %406 = math.tanh %405 : vector<8x32xf32>
    %407 = arith.mulf %400, %406 : vector<8x32xf32>
    %408 = vector.extract_strided_slice %13 {offsets = [48, 0], sizes = [8, 128], strides = [1, 1]} : vector<64x128xf32> to vector<8x128xf32>
    %cst_130 = arith.constant dense<0.000000e+00> : vector<8x128xf32>
    %409 = tpu.matmul %407, %1, %cst_130 {dimension_numbers = #tpu.dot_dimension_numbers<[1], [0], [0], [1], [0, 0, 1, 1], [], []>} : vector<8x32xf32>, vector<32x128xf32>, vector<8x128xf32> -> vector<8x128xf32>
    %410 = arith.addf %408, %409 : vector<8x128xf32>
    %cst_131 = arith.constant 5.000000e-01 : f32
    %411 = vector.broadcast %cst_131 : f32 to vector<8x128xf32>
    %412 = arith.mulf %411, %410 : vector<8x128xf32>
    %413 = math.tanh %412 : vector<8x128xf32>
    %414 = vector.extract_strided_slice %413 {offsets = [0, 0], sizes = [8, 32], strides = [1, 1]} : vector<8x128xf32> to vector<8x32xf32>
    %cst_132 = arith.constant 1.000000e+00 : f32
    %415 = vector.broadcast %cst_132 : f32 to vector<8x32xf32>
    %416 = arith.addf %414, %415 : vector<8x32xf32>
    %cst_133 = arith.constant 5.000000e-01 : f32
    %417 = vector.broadcast %cst_133 : f32 to vector<8x32xf32>
    %418 = arith.mulf %417, %416 : vector<8x32xf32>
    %419 = vector.extract_strided_slice %413 {offsets = [0, 32], sizes = [8, 32], strides = [1, 1]} : vector<8x128xf32> to vector<8x32xf32>
    %cst_134 = arith.constant 1.000000e+00 : f32
    %420 = vector.broadcast %cst_134 : f32 to vector<8x32xf32>
    %421 = arith.addf %419, %420 : vector<8x32xf32>
    %cst_135 = arith.constant 5.000000e-01 : f32
    %422 = vector.broadcast %cst_135 : f32 to vector<8x32xf32>
    %423 = arith.mulf %422, %421 : vector<8x32xf32>
    %424 = vector.extract_strided_slice %413 {offsets = [0, 96], sizes = [8, 32], strides = [1, 1]} : vector<8x128xf32> to vector<8x32xf32>
    %cst_136 = arith.constant 1.000000e+00 : f32
    %425 = vector.broadcast %cst_136 : f32 to vector<8x32xf32>
    %426 = arith.addf %424, %425 : vector<8x32xf32>
    %cst_137 = arith.constant 5.000000e-01 : f32
    %427 = vector.broadcast %cst_137 : f32 to vector<8x32xf32>
    %428 = arith.mulf %427, %426 : vector<8x32xf32>
    %429 = vector.extract_strided_slice %410 {offsets = [0, 64], sizes = [8, 32], strides = [1, 1]} : vector<8x128xf32> to vector<8x32xf32>
    %430 = math.tanh %429 : vector<8x32xf32>
    %431 = arith.mulf %423, %405 : vector<8x32xf32>
    %432 = arith.mulf %418, %430 : vector<8x32xf32>
    %433 = arith.addf %431, %432 : vector<8x32xf32>
    %434 = math.tanh %433 : vector<8x32xf32>
    %435 = arith.mulf %428, %434 : vector<8x32xf32>
    %436 = vector.extract_strided_slice %13 {offsets = [56, 0], sizes = [8, 128], strides = [1, 1]} : vector<64x128xf32> to vector<8x128xf32>
    %cst_138 = arith.constant dense<0.000000e+00> : vector<8x128xf32>
    %437 = tpu.matmul %435, %1, %cst_138 {dimension_numbers = #tpu.dot_dimension_numbers<[1], [0], [0], [1], [0, 0, 1, 1], [], []>} : vector<8x32xf32>, vector<32x128xf32>, vector<8x128xf32> -> vector<8x128xf32>
    %438 = arith.addf %436, %437 : vector<8x128xf32>
    %cst_139 = arith.constant 5.000000e-01 : f32
    %439 = vector.broadcast %cst_139 : f32 to vector<8x128xf32>
    %440 = arith.mulf %439, %438 : vector<8x128xf32>
    %441 = math.tanh %440 : vector<8x128xf32>
    %442 = vector.extract_strided_slice %441 {offsets = [0, 0], sizes = [8, 32], strides = [1, 1]} : vector<8x128xf32> to vector<8x32xf32>
    %cst_140 = arith.constant 1.000000e+00 : f32
    %443 = vector.broadcast %cst_140 : f32 to vector<8x32xf32>
    %444 = arith.addf %442, %443 : vector<8x32xf32>
    %cst_141 = arith.constant 5.000000e-01 : f32
    %445 = vector.broadcast %cst_141 : f32 to vector<8x32xf32>
    %446 = arith.mulf %445, %444 : vector<8x32xf32>
    %447 = vector.extract_strided_slice %441 {offsets = [0, 32], sizes = [8, 32], strides = [1, 1]} : vector<8x128xf32> to vector<8x32xf32>
    %cst_142 = arith.constant 1.000000e+00 : f32
    %448 = vector.broadcast %cst_142 : f32 to vector<8x32xf32>
    %449 = arith.addf %447, %448 : vector<8x32xf32>
    %cst_143 = arith.constant 5.000000e-01 : f32
    %450 = vector.broadcast %cst_143 : f32 to vector<8x32xf32>
    %451 = arith.mulf %450, %449 : vector<8x32xf32>
    %452 = vector.extract_strided_slice %441 {offsets = [0, 96], sizes = [8, 32], strides = [1, 1]} : vector<8x128xf32> to vector<8x32xf32>
    %cst_144 = arith.constant 1.000000e+00 : f32
    %453 = vector.broadcast %cst_144 : f32 to vector<8x32xf32>
    %454 = arith.addf %452, %453 : vector<8x32xf32>
    %cst_145 = arith.constant 5.000000e-01 : f32
    %455 = vector.broadcast %cst_145 : f32 to vector<8x32xf32>
    %456 = arith.mulf %455, %454 : vector<8x32xf32>
    %457 = vector.extract_strided_slice %438 {offsets = [0, 64], sizes = [8, 32], strides = [1, 1]} : vector<8x128xf32> to vector<8x32xf32>
    %458 = math.tanh %457 : vector<8x32xf32>
    %459 = arith.mulf %451, %433 : vector<8x32xf32>
    %460 = arith.mulf %446, %458 : vector<8x32xf32>
    %461 = arith.addf %459, %460 : vector<8x32xf32>
    %462 = math.tanh %461 : vector<8x32xf32>
    %463 = arith.mulf %456, %462 : vector<8x32xf32>
    %464 = tpu.concatenate %267, %295, %323, %351, %379, %407, %435, %463 in 0 : vector<8x32xf32>, vector<8x32xf32>, vector<8x32xf32>, vector<8x32xf32>, vector<8x32xf32>, vector<8x32xf32>, vector<8x32xf32>, vector<8x32xf32> -> vector<64x32xf32>
    %c0_146 = arith.constant 0 : index
    %c0_147 = arith.constant 0 : index
    %465 = vector.load %arg9[%c0_146, %c0_147] : memref<32x128xf32, #tpu.memory_space<vmem>>, vector<32x128xf32>
    %cst_148 = arith.constant dense<0.000000e+00> : vector<64x128xf32>
    %466 = tpu.matmul %464, %465, %cst_148 {dimension_numbers = #tpu.dot_dimension_numbers<[1], [0], [0], [1], [0, 0, 1, 1], [], []>} : vector<64x32xf32>, vector<32x128xf32>, vector<64x128xf32> -> vector<64x128xf32>
    %c0_149 = arith.constant 0 : index
    %c0_150 = arith.constant 0 : index
    %467 = vector.load %arg10[%c0_149, %c0_150] : memref<1x128xf32, #tpu.memory_space<vmem>>, vector<1x128xf32>
    %468 = vector.broadcast %467 : vector<1x128xf32> to vector<64x128xf32>
    %469 = arith.addf %466, %468 : vector<64x128xf32>
    %c0_151 = arith.constant 0 : index
    %c0_152 = arith.constant 0 : index
    %470 = vector.load %arg11[%c0_151, %c0_152] : memref<64x128xf32, #tpu.memory_space<vmem>>, vector<64x128xf32>
    tpu.vector_store %arg11[%c0_151, %c0_152], %469 {strides = array<i32>} : memref<64x128xf32, #tpu.memory_space<vmem>>, vector<64x128xf32>,
    return
  }
  func.func @transform_0(%arg0: i32) -> (i32, i32) {
    %c0_i32 = arith.constant 0 : i32
    %c0_i32_0 = arith.constant 0 : i32
    %c0_i32_1 = arith.constant 0 : i32
    return %c0_i32, %c0_i32_0 : i32, i32
  }
  func.func @transform_1(%arg0: i32) -> (i32, i32) {
    %c0_i32 = arith.constant 0 : i32
    %c0_i32_0 = arith.constant 0 : i32
    %c0_i32_1 = arith.constant 0 : i32
    return %c0_i32, %c0_i32_0 : i32, i32
  }
  func.func @transform_2(%arg0: i32) -> (i32, i32) {
    %c0_i32 = arith.constant 0 : i32
    %c0_i32_0 = arith.constant 0 : i32
    %c0_i32_1 = arith.constant 0 : i32
    return %c0_i32, %c0_i32_0 : i32, i32
  }
  func.func @transform_3(%arg0: i32) -> (i32, i32) {
    %c0_i32 = arith.constant 0 : i32
    %c0_i32_0 = arith.constant 0 : i32
    %c0_i32_1 = arith.constant 0 : i32
    return %c0_i32, %c0_i32_0 : i32, i32
  }
  func.func @transform_4(%arg0: i32) -> (i32, i32) {
    %c0_i32 = arith.constant 0 : i32
    %c0_i32_0 = arith.constant 0 : i32
    %c0_i32_1 = arith.constant 0 : i32
    return %c0_i32, %c0_i32_0 : i32, i32
  }
  func.func @transform_5(%arg0: i32) -> (i32, i32) {
    %c0_i32 = arith.constant 0 : i32
    %c0_i32_0 = arith.constant 0 : i32
    %c0_i32_1 = arith.constant 0 : i32
    return %c0_i32, %c0_i32_0 : i32, i32
  }
  func.func @transform_6(%arg0: i32) -> (i32, i32) {
    %c0_i32 = arith.constant 0 : i32
    %c0_i32_0 = arith.constant 0 : i32
    %c0_i32_1 = arith.constant 0 : i32
    return %c0_i32, %c0_i32_0 : i32, i32
  }
  func.func @transform_7(%arg0: i32) -> (i32, i32) {
    %c0_i32 = arith.constant 0 : i32
    %c0_i32_0 = arith.constant 0 : i32
    %c0_i32_1 = arith.constant 0 : i32
    return %c0_i32, %c0_i32_0 : i32, i32
  }
  func.func @transform_8(%arg0: i32) -> (i32, i32) {
    %c0_i32 = arith.constant 0 : i32
    %c0_i32_0 = arith.constant 0 : i32
    %c0_i32_1 = arith.constant 0 : i32
    return %c0_i32, %c0_i32_0 : i32, i32
  }
  func.func @transform_9(%arg0: i32) -> (i32, i32) {
    %c0_i32 = arith.constant 0 : i32
    %c0_i32_0 = arith.constant 0 : i32
    %c0_i32_1 = arith.constant 0 : i32
    return %c0_i32, %c0_i32_0 : i32, i32
  }
  func.func @transform_10(%arg0: i32) -> (i32, i32) {
    %c0_i32 = arith.constant 0 : i32
    %c0_i32_0 = arith.constant 0 : i32
    %c0_i32_1 = arith.constant 0 : i32
    return %c0_i32, %c0_i32_0 : i32, i32
  }
}

</mosaic_0001>

<llo_original>
// kernel: seq2seq_forward.1
$region0: #{seq2seq_forward.1}
  #allocation0 [shape = 'u32[]', space=smem, size = 0x4, offset = 0x4, fixed_abs, tag = 'smem constant byte address 0x4 - core index']
  #allocation1 [shape = 'u32[144,128]{1,0:T(1,128)}', space=vmem, size = 0x12000, scoped, tag = 'internal scratch']
  %s0 = inlined_call_operand.vmem [shape: f32[64,32], index: 0, kind: input, shape index: {}]
  %s1 = inlined_call_operand.vmem [shape: f32[64,32], index: 1, kind: input, shape index: {}]
  %s2 = inlined_call_operand.vmem [shape: f32[32,128], index: 2, kind: input, shape index: {}]
  %s3 = inlined_call_operand.vmem [shape: f32[32,128], index: 3, kind: input, shape index: {}]
  %s4 = inlined_call_operand.vmem [shape: f32[1,128], index: 4, kind: input, shape index: {}]
  %s5 = inlined_call_operand.vmem [shape: f32[32,128], index: 5, kind: input, shape index: {}]
  %s6 = inlined_call_operand.vmem [shape: f32[32,128], index: 6, kind: input, shape index: {}]
  %s7 = inlined_call_operand.vmem [shape: f32[1,128], index: 7, kind: input, shape index: {}]
  %s8 = inlined_call_operand.vmem [shape: f32[32,128], index: 8, kind: input, shape index: {}]
  %s9 = inlined_call_operand.vmem [shape: f32[1,128], index: 9, kind: input, shape index: {}]
  %s10 = inlined_call_operand.vmem [shape: f32[64,128], index: 10, kind: output, shape index: {}]
  %s11 = sld [smem:[#allocation0]]
  $region50: #{seq2seq_forward.1} parent=0
    _
  %s13 = ssub.s32 1, %s11
  %s14 = scalar_select 0, %s13, %s11
  // Predicated region
  $region2: #{seq2seq_forward.1} parent=0 // pred_check
    _
  $region3: #{seq2seq_forward.1} parent=0 // pred_check_branch
    %16 = sbr.rel (0) target = $region5
  $region4: #{seq2seq_forward.1} parent=0 // pred_region
    _
  $region5: #{seq2seq_forward.1} parent=0 // pred_fallthru
    _
  // Predicated region
  $region6: #{seq2seq_forward.1} parent=0 // pred_check
    _
  $region7: #{seq2seq_forward.1} parent=0 // pred_check_branch
    %18 = sbr.rel (0) target = $region9
  $region8: #{seq2seq_forward.1} parent=0 // pred_region
    _
  $region9: #{seq2seq_forward.1} parent=0 // pred_fallthru
    _
  // Predicated region
  $region10: #{seq2seq_forward.1} parent=0 // pred_check
    _
  $region11: #{seq2seq_forward.1} parent=0 // pred_check_branch
    %20 = sbr.rel (0) target = $region13
  $region12: #{seq2seq_forward.1} parent=0 // pred_region
    _
  $region13: #{seq2seq_forward.1} parent=0 // pred_fallthru
    _
  // Predicated region
  $region14: #{seq2seq_forward.1} parent=0 // pred_check
    _
  $region15: #{seq2seq_forward.1} parent=0 // pred_check_branch
    %22 = sbr.rel (0) target = $region17
  $region16: #{seq2seq_forward.1} parent=0 // pred_region
    _
  $region17: #{seq2seq_forward.1} parent=0 // pred_fallthru
    _
  // Predicated region
  $region18: #{seq2seq_forward.1} parent=0 // pred_check
    _
  $region19: #{seq2seq_forward.1} parent=0 // pred_check_branch
    %24 = sbr.rel (0) target = $region21
  $region20: #{seq2seq_forward.1} parent=0 // pred_region
    _
  $region21: #{seq2seq_forward.1} parent=0 // pred_fallthru
    _
  // Predicated region
  $region22: #{seq2seq_forward.1} parent=0 // pred_check
    _
  $region23: #{seq2seq_forward.1} parent=0 // pred_check_branch
    %26 = sbr.rel (0) target = $region25
  $region24: #{seq2seq_forward.1} parent=0 // pred_region
    _
  $region25: #{seq2seq_forward.1} parent=0 // pred_fallthru
    _
  // Predicated region
  $region26: #{seq2seq_forward.1} parent=0 // pred_check
    _
  $region27: #{seq2seq_forward.1} parent=0 // pred_check_branch
    %28 = sbr.rel (0) target = $region29
  $region28: #{seq2seq_forward.1} parent=0 // pred_region
    _
  $region29: #{seq2seq_forward.1} parent=0 // pred_fallthru
    _
  // Predicated region
  $region30: #{seq2seq_forward.1} parent=0 // pred_check
    _
  $region31: #{seq2seq_forward.1} parent=0 // pred_check_branch
    %30 = sbr.rel (0) target = $region33
  $region32: #{seq2seq_forward.1} parent=0 // pred_region
    _
  $region33: #{seq2seq_forward.1} parent=0 // pred_fallthru
    _
  // Predicated region
  $region34: #{seq2seq_forward.1} parent=0 // pred_check
    _
  $region35: #{seq2seq_forward.1} parent=0 // pred_check_branch
    %32 = sbr.rel (0) target = $region37
  $region36: #{seq2seq_forward.1} parent=0 // pred_region
    _
  $region37: #{seq2seq_forward.1} parent=0 // pred_fallthru
    _
  // Predicated region
  $region38: #{seq2seq_forward.1} parent=0 // pred_check
    _
  $region39: #{seq2seq_forward.1} parent=0 // pred_check_branch
    %34 = sbr.rel (0) target = $region41
  $region40: #{seq2seq_forward.1} parent=0 // pred_region
    _
  $region41: #{seq2seq_forward.1} parent=0 // pred_fallthru
    _
  %v35 = vld [vmem:[%s3] sm:$0xff]
  %v36 = vld [vmem:[%s3 + $0x8] sm:$0xff]
  %v37 = vld [vmem:[%s3 + $0x10] sm:$0xff]
  %v38 = vld [vmem:[%s3 + $0x18] sm:$0xff]
  %v39 = vld [vmem:[%s6] sm:$0xff]
  %v40 = vld [vmem:[%s6 + $0x8] sm:$0xff]
  %v41 = vld [vmem:[%s6 + $0x10] sm:$0xff]
  %v42 = vld [vmem:[%s6 + $0x18] sm:$0xff]
  %v43 = vld [vmem:[%s0] sm:$0xff]
  %v44 = vld [vmem:[%s0 + $0x8] sm:$0xff]
  %v45 = vld [vmem:[%s0 + $0x10] sm:$0xff]
  %v46 = vld [vmem:[%s0 + $0x18] sm:$0xff]
  %v47 = vld [vmem:[%s0 + $0x20] sm:$0xff]
  %v48 = vld [vmem:[%s0 + $0x28] sm:$0xff]
  %v49 = vld [vmem:[%s0 + $0x30] sm:$0xff]
  %v50 = vld [vmem:[%s0 + $0x38] sm:$0xff]
  %v51 = vld [vmem:[%s2] sm:$0xff]
  %v52 = vld [vmem:[%s2 + $0x8] sm:$0xff]
  %v53 = vld [vmem:[%s2 + $0x10] sm:$0xff]
  %v54 = vld [vmem:[%s2 + $0x18] sm:$0xff]
  %v55 = vld [vmem:[%s4] sm:$0x1]
  %v57 = vlaneseq
  %v58 = vshrl.u32 %v57, 7
  %v59 = vsub.s32 0, %v58
  %v60 = vrot.slane %v55, %v59
  %vm62 = vcmask 261120
  %v64 = vsel %vm62, %v43, 0
  %v67 = vsel %vm62, %v44, 0
  %v70 = vsel %vm62, %v45, 0
  %v73 = vsel %vm62, %v46, 0
  %v76 = vsel %vm62, %v47, 0
  %v79 = vsel %vm62, %v48, 0
  %v82 = vsel %vm62, %v49, 0
  %v85 = vsel %vm62, %v50, 0
  %87 = vmatprep.subr.mxu0 0.0
  %88 = vmatpush1.msra.mxu0 %v51
  %89 = vmatprep.subr.mxu0 0.0
  %90 = vmatpush1.msra.mxu0 %v52
  %91 = vmatprep.subr.mxu0 0.0
  %92 = vmatpush1.msra.mxu0 %v53
  %93 = vmatprep.subr.mxu0 0.0
  %94 = vmatpush1.msra.mxu0 %v54
  %95 = vmatprep.subr.mxu0 0.0
  %96 = vmatpush1.msra.mxu0 0.0
  %97 = vmatprep.subr.mxu0 0.0
  %98 = vmatpush1.msra.mxu0 0.0
  %99 = vmatprep.subr.mxu0 0.0
  %100 = vmatpush1.msra.mxu0 0.0
  %101 = vmatprep.subr.mxu0 0.0
  %102 = vmatpush1.msra.mxu0 0.0
  %103 = vmatprep.subr.mxu0 0.0
  %104 = vmatpush1.msra.mxu0 0.0
  %105 = vmatprep.subr.mxu0 0.0
  %106 = vmatpush1.msra.mxu0 0.0
  %107 = vmatprep.subr.mxu0 0.0
  %108 = vmatpush1.msra.mxu0 0.0
  %109 = vmatprep.subr.mxu0 0.0
  %110 = vmatpush1.msra.mxu0 0.0
  %111 = vmatprep.subr.mxu0 0.0
  %112 = vmatpush1.msra.mxu0 0.0
  %113 = vmatprep.subr.mxu0 0.0
  %114 = vmatpush1.msra.mxu0 0.0
  %115 = vmatprep.subr.mxu0 0.0
  %116 = vmatpush1.msra.mxu0 0.0
  %117 = vmatprep.subr.mxu0 0.0
  %118 = vmatpush1.msra.mxu0 0.0
  %119 = vmatprep.subr.mxu0 0.0
  %120 = vmatpush1.msra.mxu0 0.0
  %121 = vmatprep.subr.mxu0 0.0
  %122 = vmatpush1.msra.mxu0 0.0
  %123 = vmatprep.subr.mxu0 0.0
  %124 = vmatpush1.msra.mxu0 0.0
  %125 = vmatprep.subr.mxu0 0.0
  %126 = vmatpush1.msra.mxu0 0.0
  %127 = vmatprep.subr.mxu0 0.0
  %128 = vmatpush1.msra.mxu0 0.0
  %129 = vmatprep.subr.mxu0 0.0
  %130 = vmatpush1.msra.mxu0 0.0
  %131 = vmatprep.subr.mxu0 0.0
  %132 = vmatpush1.msra.mxu0 0.0
  %133 = vmatprep.subr.mxu0 0.0
  %134 = vmatpush1.msra.mxu0 0.0
  %135 = vmatprep.subr.mxu0 0.0
  %136 = vmatpush1.msra.mxu0 0.0
  %137 = vmatprep.subr.mxu0 0.0
  %138 = vmatpush1.msra.mxu0 0.0
  %139 = vmatprep.subr.mxu0 0.0
  %140 = vmatpush1.msra.mxu0 0.0
  %141 = vmatprep.subr.mxu0 0.0
  %142 = vmatpush1.msra.mxu0 0.0
  %143 = vmatprep.subr.mxu0 0.0
  %144 = vmatpush1.msra.mxu0 0.0
  %145 = vmatprep.subr.mxu0 0.0
  %146 = vmatpush1.msra.mxu0 0.0
  %147 = vmatprep.subr.mxu0 0.0
  %148 = vmatpush1.msra.mxu0 0.0
  %149 = vmatprep.subr.mxu0 0.0
  %150 = vmatpush1.msra.mxu0 0.0
  %151 = vmatprep.mubr.f32.mxu0 0.0
  %152 = vmatmul.mubr.f32.gmra.mrb[0].mxu0 %v64
  %v153 = vpop.f32.mrb[0].mxu0
  %v154 = vadd.f32 %v60, %v153
  %v155 = vpop.f32.mrb[0].mxu0
  %156 = vmatprep.mubr.f32.mxu0 0.0
  %157 = vmatmul.mubr.f32.gmra.mrb[0].mxu0 %v67
  %v158 = vpop.f32.mrb[0].mxu0
  %v159 = vadd.f32 %v60, %v158
  %v160 = vpop.f32.mrb[0].mxu0
  %161 = vmatprep.mubr.f32.mxu0 0.0
  %162 = vmatmul.mubr.f32.gmra.mrb[0].mxu0 %v70
  %v163 = vpop.f32.mrb[0].mxu0
  %v164 = vadd.f32 %v60, %v163
  %v165 = vpop.f32.mrb[0].mxu0
  %166 = vmatprep.mubr.f32.mxu0 0.0
  %167 = vmatmul.mubr.f32.gmra.mrb[0].mxu0 %v73
  %v168 = vpop.f32.mrb[0].mxu0
  %v169 = vadd.f32 %v60, %v168
  %v170 = vpop.f32.mrb[0].mxu0
  %171 = vmatprep.mubr.f32.mxu0 0.0
  %172 = vmatmul.mubr.f32.gmra.mrb[0].mxu0 %v76
  %v173 = vpop.f32.mrb[0].mxu0
  %v174 = vadd.f32 %v60, %v173
  %v175 = vpop.f32.mrb[0].mxu0
  %176 = vmatprep.mubr.f32.mxu0 0.0
  %177 = vmatmul.mubr.f32.gmra.mrb[0].mxu0 %v79
  %v178 = vpop.f32.mrb[0].mxu0
  %v179 = vadd.f32 %v60, %v178
  %v180 = vpop.f32.mrb[0].mxu0
  %181 = vmatprep.mubr.f32.mxu0 0.0
  %182 = vmatmul.mubr.f32.gmra.mrb[0].mxu0 %v82
  %v183 = vpop.f32.mrb[0].mxu0
  %v184 = vadd.f32 %v60, %v183
  %v185 = vpop.f32.mrb[0].mxu0
  %186 = vmatprep.mubr.f32.mxu0 0.0
  %187 = vmatmul.mubr.f32.gmra.mrb[0].mxu0 %v85
  %v188 = vpop.f32.mrb[0].mxu0
  %v189 = vadd.f32 %v60, %v188
  %v190 = vpop.f32.mrb[0].mxu0
  %191 = vdwg.mxu0
  %v192 = vld [vmem:[%s1] sm:$0xff]
  %v193 = vld [vmem:[%s1 + $0x8] sm:$0xff]
  %v194 = vld [vmem:[%s1 + $0x10] sm:$0xff]
  %v195 = vld [vmem:[%s1 + $0x18] sm:$0xff]
  %v196 = vld [vmem:[%s1 + $0x20] sm:$0xff]
  %v197 = vld [vmem:[%s1 + $0x28] sm:$0xff]
  %v198 = vld [vmem:[%s1 + $0x30] sm:$0xff]
  %v199 = vld [vmem:[%s1 + $0x38] sm:$0xff]
  %v200 = vld [vmem:[%s5] sm:$0xff]
  %v201 = vld [vmem:[%s5 + $0x8] sm:$0xff]
  %v202 = vld [vmem:[%s5 + $0x10] sm:$0xff]
  %v203 = vld [vmem:[%s5 + $0x18] sm:$0xff]
  %v204 = vld [vmem:[%s7] sm:$0x1]
  %v206 = vlaneseq
  %v207 = vshrl.u32 %v206, 7
  %v208 = vsub.s32 0, %v207
  %v209 = vrot.slane %v204, %v208
  %v212 = vsel %vm62, %v192, 0
  %v215 = vsel %vm62, %v193, 0
  %v218 = vsel %vm62, %v194, 0
  %v221 = vsel %vm62, %v195, 0
  %v224 = vsel %vm62, %v196, 0
  %v227 = vsel %vm62, %v197, 0
  %v230 = vsel %vm62, %v198, 0
  %v233 = vsel %vm62, %v199, 0
  %235 = vmatprep.subr.mxu0 0.0
  %236 = vmatpush1.msra.mxu0 %v200
  %237 = vmatprep.subr.mxu0 0.0
  %238 = vmatpush1.msra.mxu0 %v201
  %239 = vmatprep.subr.mxu0 0.0
  %240 = vmatpush1.msra.mxu0 %v202
  %241 = vmatprep.subr.mxu0 0.0
  %242 = vmatpush1.msra.mxu0 %v203
  %243 = vmatprep.subr.mxu0 0.0
  %244 = vmatpush1.msra.mxu0 0.0
  %245 = vmatprep.subr.mxu0 0.0
  %246 = vmatpush1.msra.mxu0 0.0
  %247 = vmatprep.subr.mxu0 0.0
  %248 = vmatpush1.msra.mxu0 0.0
  %249 = vmatprep.subr.mxu0 0.0
  %250 = vmatpush1.msra.mxu0 0.0
  %251 = vmatprep.subr.mxu0 0.0
  %252 = vmatpush1.msra.mxu0 0.0
  %253 = vmatprep.subr.mxu0 0.0
  %254 = vmatpush1.msra.mxu0 0.0
  %255 = vmatprep.subr.mxu0 0.0
  %256 = vmatpush1.msra.mxu0 0.0
  %257 = vmatprep.subr.mxu0 0.0
  %258 = vmatpush1.msra.mxu0 0.0
  %259 = vmatprep.subr.mxu0 0.0
  %260 = vmatpush1.msra.mxu0 0.0
  %261 = vmatprep.subr.mxu0 0.0
  %262 = vmatpush1.msra.mxu0 0.0
  %263 = vmatprep.subr.mxu0 0.0
  %264 = vmatpush1.msra.mxu0 0.0
  %265 = vmatprep.subr.mxu0 0.0
  %266 = vmatpush1.msra.mxu0 0.0
  %267 = vmatprep.subr.mxu0 0.0
  %268 = vmatpush1.msra.mxu0 0.0
  %269 = vmatprep.subr.mxu0 0.0
  %270 = vmatpush1.msra.mxu0 0.0
  %271 = vmatprep.subr.mxu0 0.0
  %272 = vmatpush1.msra.mxu0 0.0
  %273 = vmatprep.subr.mxu0 0.0
  %274 = vmatpush1.msra.mxu0 0.0
  %275 = vmatprep.subr.mxu0 0.0
  %276 = vmatpush1.msra.mxu0 0.0
  %277 = vmatprep.subr.mxu0 0.0
  %278 = vmatpush1.msra.mxu0 0.0
  %279 = vmatprep.subr.mxu0 0.0
  %280 = vmatpush1.msra.mxu0 0.0
  %281 = vmatprep.subr.mxu0 0.0
  %282 = vmatpush1.msra.mxu0 0.0
  %283 = vmatprep.subr.mxu0 0.0
  %284 = vmatpush1.msra.mxu0 0.0
  %285 = vmatprep.subr.mxu0 0.0
  %286 = vmatpush1.msra.mxu0 0.0
  %287 = vmatprep.subr.mxu0 0.0
  %288 = vmatpush1.msra.mxu0 0.0
  %289 = vmatprep.subr.mxu0 0.0
  %290 = vmatpush1.msra.mxu0 0.0
  %291 = vmatprep.subr.mxu0 0.0
  %292 = vmatpush1.msra.mxu0 0.0
  %293 = vmatprep.subr.mxu0 0.0
  %294 = vmatpush1.msra.mxu0 0.0
  %295 = vmatprep.subr.mxu0 0.0
  %296 = vmatpush1.msra.mxu0 0.0
  %297 = vmatprep.subr.mxu0 0.0
  %298 = vmatpush1.msra.mxu0 0.0
  %299 = vmatprep.mubr.f32.mxu0 0.0
  %300 = vmatmul.mubr.f32.gmra.mrb[0].mxu0 %v212
  %v301 = vpop.f32.mrb[0].mxu0
  %v302 = vadd.f32 %v209, %v301
  %v303 = vpop.f32.mrb[0].mxu0
  %304 = vmatprep.mubr.f32.mxu0 0.0
  %305 = vmatmul.mubr.f32.gmra.mrb[0].mxu0 %v215
  %v306 = vpop.f32.mrb[0].mxu0
  %v307 = vadd.f32 %v209, %v306
  %v308 = vpop.f32.mrb[0].mxu0
  %309 = vmatprep.mubr.f32.mxu0 0.0
  %310 = vmatmul.mubr.f32.gmra.mrb[0].mxu0 %v218
  %v311 = vpop.f32.mrb[0].mxu0
  %v312 = vadd.f32 %v209, %v311
  %v313 = vpop.f32.mrb[0].mxu0
  %314 = vmatprep.mubr.f32.mxu0 0.0
  %315 = vmatmul.mubr.f32.gmra.mrb[0].mxu0 %v221
  %v316 = vpop.f32.mrb[0].mxu0
  %v317 = vadd.f32 %v209, %v316
  %v318 = vpop.f32.mrb[0].mxu0
  %319 = vmatprep.mubr.f32.mxu0 0.0
  %320 = vmatmul.mubr.f32.gmra.mrb[0].mxu0 %v224
  %v321 = vpop.f32.mrb[0].mxu0
  %v322 = vadd.f32 %v209, %v321
  %v323 = vpop.f32.mrb[0].mxu0
  %324 = vmatprep.mubr.f32.mxu0 0.0
  %325 = vmatmul.mubr.f32.gmra.mrb[0].mxu0 %v227
  %v326 = vpop.f32.mrb[0].mxu0
  %v327 = vadd.f32 %v209, %v326
  %v328 = vpop.f32.mrb[0].mxu0
  %329 = vmatprep.mubr.f32.mxu0 0.0
  %330 = vmatmul.mubr.f32.gmra.mrb[0].mxu0 %v230
  %v331 = vpop.f32.mrb[0].mxu0
  %v332 = vadd.f32 %v209, %v331
  %v333 = vpop.f32.mrb[0].mxu0
  %334 = vmatprep.mubr.f32.mxu0 0.0
  %335 = vmatmul.mubr.f32.gmra.mrb[0].mxu0 %v233
  %v336 = vpop.f32.mrb[0].mxu0
  %v337 = vadd.f32 %v209, %v336
  %v338 = vpop.f32.mrb[0].mxu0
  %339 = vdwg.mxu0
  %v341 = vsel %vm62, 0.0, 0
  %343 = vmatprep.subr.mxu0 0.0
  %344 = vmatpush1.msra.mxu0 %v35
  %345 = vmatprep.subr.mxu0 0.0
  %346 = vmatpush1.msra.mxu0 %v36
  %347 = vmatprep.subr.mxu0 0.0
  %348 = vmatpush1.msra.mxu0 %v37
  %349 = vmatprep.subr.mxu0 0.0
  %350 = vmatpush1.msra.mxu0 %v38
  %351 = vmatprep.subr.mxu0 0.0
  %352 = vmatpush1.msra.mxu0 0.0
  %353 = vmatprep.subr.mxu0 0.0
  %354 = vmatpush1.msra.mxu0 0.0
  %355 = vmatprep.subr.mxu0 0.0
  %356 = vmatpush1.msra.mxu0 0.0
  %357 = vmatprep.subr.mxu0 0.0
  %358 = vmatpush1.msra.mxu0 0.0
  %359 = vmatprep.subr.mxu0 0.0
  %360 = vmatpush1.msra.mxu0 0.0
  %361 = vmatprep.subr.mxu0 0.0
  %362 = vmatpush1.msra.mxu0 0.0
  %363 = vmatprep.subr.mxu0 0.0
  %364 = vmatpush1.msra.mxu0 0.0
  %365 = vmatprep.subr.mxu0 0.0
  %366 = vmatpush1.msra.mxu0 0.0
  %367 = vmatprep.subr.mxu0 0.0
  %368 = vmatpush1.msra.mxu0 0.0
  %369 = vmatprep.subr.mxu0 0.0
  %370 = vmatpush1.msra.mxu0 0.0
  %371 = vmatprep.subr.mxu0 0.0
  %372 = vmatpush1.msra.mxu0 0.0
  %373 = vmatprep.subr.mxu0 0.0
  %374 = vmatpush1.msra.mxu0 0.0
  %375 = vmatprep.subr.mxu0 0.0
  %376 = vmatpush1.msra.mxu0 0.0
  %377 = vmatprep.subr.mxu0 0.0
  %378 = vmatpush1.msra.mxu0 0.0
  %379 = vmatprep.subr.mxu0 0.0
  %380 = vmatpush1.msra.mxu0 0.0
  %381 = vmatprep.subr.mxu0 0.0
  %382 = vmatpush1.msra.mxu0 0.0
  %383 = vmatprep.subr.mxu0 0.0
  %384 = vmatpush1.msra.mxu0 0.0
  %385 = vmatprep.subr.mxu0 0.0
  %386 = vmatpush1.msra.mxu0 0.0
  %387 = vmatprep.subr.mxu0 0.0
  %388 = vmatpush1.msra.mxu0 0.0
  %389 = vmatprep.subr.mxu0 0.0
  %390 = vmatpush1.msra.mxu0 0.0
  %391 = vmatprep.subr.mxu0 0.0
  %392 = vmatpush1.msra.mxu0 0.0
  %393 = vmatprep.subr.mxu0 0.0
  %394 = vmatpush1.msra.mxu0 0.0
  %395 = vmatprep.subr.mxu0 0.0
  %396 = vmatpush1.msra.mxu0 0.0
  %397 = vmatprep.subr.mxu0 0.0
  %398 = vmatpush1.msra.mxu0 0.0
  %399 = vmatprep.subr.mxu0 0.0
  %400 = vmatpush1.msra.mxu0 0.0
  %401 = vmatprep.subr.mxu0 0.0
  %402 = vmatpush1.msra.mxu0 0.0
  %403 = vmatprep.subr.mxu0 0.0
  %404 = vmatpush1.msra.mxu0 0.0
  %405 = vmatprep.subr.mxu0 0.0
  %406 = vmatpush1.msra.mxu0 0.0
  %407 = vmatprep.mubr.f32.mxu0 0.0
  %408 = vmatmul.mubr.f32.gmra.mrb[0].mxu0 %v341
  %v409 = vpop.f32.mrb[0].mxu0
  %v410 = vadd.f32 0.0, %v409
  %v411 = vpop.f32.mrb[0].mxu0
  %412 = vdwg.mxu0
  %v413 = vadd.f32 %v154, %v410
  %v414 = vmul.f32 %v413, 0.5
  %v415 = vtanh.pop %v414
  %v416 = vadd.f32 %v415, 1.0
  %v417 = vmul.f32 %v416, 0.5
  %v418 = vtanh.pop %v413
  %v419 = vmul.f32 %v417, 0.0
  %421 = vrot.lane.b32.xlu0 %v418, 64
  %v422 = vpop.permute.xlu0 %421
  %v424 = vmul.f32 %v417, %v422
  %426 = vrot.lane.b32.xlu0 %v424, 32
  %v427 = vpop.permute.xlu0 %426
  %v429 = vadd.f32 %v419, %v427
  %v430 = vtanh.pop %v429
  %432 = vrot.lane.b32.xlu0 %v430, 64
  %v433 = vpop.permute.xlu0 %432
  %v435 = vmul.f32 %v417, %v433
  %437 = vrot.lane.b32.xlu0 %v435, 32
  %v438 = vpop.permute.xlu0 %437
  %v439 = vsel %vm62, %v438, 0
  %441 = vmatprep.subr.mxu0 0.0
  %442 = vmatpush1.msra.mxu0 %v35
  %443 = vmatprep.subr.mxu0 0.0
  %444 = vmatpush1.msra.mxu0 %v36
  %445 = vmatprep.subr.mxu0 0.0
  %446 = vmatpush1.msra.mxu0 %v37
  %447 = vmatprep.subr.mxu0 0.0
  %448 = vmatpush1.msra.mxu0 %v38
  %449 = vmatprep.subr.mxu0 0.0
  %450 = vmatpush1.msra.mxu0 0.0
  %451 = vmatprep.subr.mxu0 0.0
  %452 = vmatpush1.msra.mxu0 0.0
  %453 = vmatprep.subr.mxu0 0.0
  %454 = vmatpush1.msra.mxu0 0.0
  %455 = vmatprep.subr.mxu0 0.0
  %456 = vmatpush1.msra.mxu0 0.0
  %457 = vmatprep.subr.mxu0 0.0
  %458 = vmatpush1.msra.mxu0 0.0
  %459 = vmatprep.subr.mxu0 0.0
  %460 = vmatpush1.msra.mxu0 0.0
  %461 = vmatprep.subr.mxu0 0.0
  %462 = vmatpush1.msra.mxu0 0.0
  %463 = vmatprep.subr.mxu0 0.0
  %464 = vmatpush1.msra.mxu0 0.0
  %465 = vmatprep.subr.mxu0 0.0
  %466 = vmatpush1.msra.mxu0 0.0
  %467 = vmatprep.subr.mxu0 0.0
  %468 = vmatpush1.msra.mxu0 0.0
  %469 = vmatprep.subr.mxu0 0.0
  %470 = vmatpush1.msra.mxu0 0.0
  %471 = vmatprep.subr.mxu0 0.0
  %472 = vmatpush1.msra.mxu0 0.0
  %473 = vmatprep.subr.mxu0 0.0
  %474 = vmatpush1.msra.mxu0 0.0
  %475 = vmatprep.subr.mxu0 0.0
  %476 = vmatpush1.msra.mxu0 0.0
  %477 = vmatprep.subr.mxu0 0.0
  %478 = vmatpush1.msra.mxu0 0.0
  %479 = vmatprep.subr.mxu0 0.0
  %480 = vmatpush1.msra.mxu0 0.0
  %481 = vmatprep.subr.mxu0 0.0
  %482 = vmatpush1.msra.mxu0 0.0
  %483 = vmatprep.subr.mxu0 0.0
  %484 = vmatpush1.msra.mxu0 0.0
  %485 = vmatprep.subr.mxu0 0.0
  %486 = vmatpush1.msra.mxu0 0.0
  %487 = vmatprep.subr.mxu0 0.0
  %488 = vmatpush1.msra.mxu0 0.0
  %489 = vmatprep.subr.mxu0 0.0
  %490 = vmatpush1.msra.mxu0 0.0
  %491 = vmatprep.subr.mxu0 0.0
  %492 = vmatpush1.msra.mxu0 0.0
  %493 = vmatprep.subr.mxu0 0.0
  %494 = vmatpush1.msra.mxu0 0.0
  %495 = vmatprep.subr.mxu0 0.0
  %496 = vmatpush1.msra.mxu0 0.0
  %497 = vmatprep.subr.mxu0 0.0
  %498 = vmatpush1.msra.mxu0 0.0
  %499 = vmatprep.subr.mxu0 0.0
  %500 = vmatpush1.msra.mxu0 0.0
  %501 = vmatprep.subr.mxu0 0.0
  %502 = vmatpush1.msra.mxu0 0.0
  %503 = vmatprep.subr.mxu0 0.0
  %504 = vmatpush1.msra.mxu0 0.0
  %505 = vmatprep.mubr.f32.mxu0 0.0
  %506 = vmatmul.mubr.f32.gmra.mrb[0].mxu0 %v439
  %v507 = vpop.f32.mrb[0].mxu0
  %v508 = vadd.f32 0.0, %v507
  %v509 = vpop.f32.mrb[0].mxu0
  %510 = vdwg.mxu0
  %v511 = vadd.f32 %v159, %v508
  %v512 = vmul.f32 %v511, 0.5
  %v513 = vtanh.pop %v512
  %v514 = vadd.f32 %v513, 1.0
  %v515 = vmul.f32 %v514, 0.5
  %v516 = vtanh.pop %v511
  %v517 = vmul.f32 %v515, %v429
  %519 = vrot.lane.b32.xlu0 %v516, 64
  %v520 = vpop.permute.xlu0 %519
  %v522 = vmul.f32 %v515, %v520
  %524 = vrot.lane.b32.xlu0 %v522, 32
  %v525 = vpop.permute.xlu0 %524
  %v527 = vadd.f32 %v517, %v525
  %v528 = vtanh.pop %v527
  %530 = vrot.lane.b32.xlu0 %v528, 64
  %v531 = vpop.permute.xlu0 %530
  %v533 = vmul.f32 %v515, %v531
  %535 = vrot.lane.b32.xlu0 %v533, 32
  %v536 = vpop.permute.xlu0 %535
  %v537 = vsel %vm62, %v536, 0
  %539 = vmatprep.subr.mxu0 0.0
  %540 = vmatpush1.msra.mxu0 %v35
  %541 = vmatprep.subr.mxu0 0.0
  %542 = vmatpush1.msra.mxu0 %v36
  %543 = vmatprep.subr.mxu0 0.0
  %544 = vmatpush1.msra.mxu0 %v37
  %545 = vmatprep.subr.mxu0 0.0
  %546 = vmatpush1.msra.mxu0 %v38
  %547 = vmatprep.subr.mxu0 0.0
  %548 = vmatpush1.msra.mxu0 0.0
  %549 = vmatprep.subr.mxu0 0.0
  %550 = vmatpush1.msra.mxu0 0.0
  %551 = vmatprep.subr.mxu0 0.0
  %552 = vmatpush1.msra.mxu0 0.0
  %553 = vmatprep.subr.mxu0 0.0
  %554 = vmatpush1.msra.mxu0 0.0
  %555 = vmatprep.subr.mxu0 0.0
  %556 = vmatpush1.msra.mxu0 0.0
  %557 = vmatprep.subr.mxu0 0.0
  %558 = vmatpush1.msra.mxu0 0.0
  %559 = vmatprep.subr.mxu0 0.0
  %560 = vmatpush1.msra.mxu0 0.0
  %561 = vmatprep.subr.mxu0 0.0
  %562 = vmatpush1.msra.mxu0 0.0
  %563 = vmatprep.subr.mxu0 0.0
  %564 = vmatpush1.msra.mxu0 0.0
  %565 = vmatprep.subr.mxu0 0.0
  %566 = vmatpush1.msra.mxu0 0.0
  %567 = vmatprep.subr.mxu0 0.0
  %568 = vmatpush1.msra.mxu0 0.0
  %569 = vmatprep.subr.mxu0 0.0
  %570 = vmatpush1.msra.mxu0 0.0
  %571 = vmatprep.subr.mxu0 0.0
  %572 = vmatpush1.msra.mxu0 0.0
  %573 = vmatprep.subr.mxu0 0.0
  %574 = vmatpush1.msra.mxu0 0.0
  %575 = vmatprep.subr.mxu0 0.0
  %576 = vmatpush1.msra.mxu0 0.0
  %577 = vmatprep.subr.mxu0 0.0
  %578 = vmatpush1.msra.mxu0 0.0
  %579 = vmatprep.subr.mxu0 0.0
  %580 = vmatpush1.msra.mxu0 0.0
  %581 = vmatprep.subr.mxu0 0.0
  %582 = vmatpush1.msra.mxu0 0.0
  %583 = vmatprep.subr.mxu0 0.0
  %584 = vmatpush1.msra.mxu0 0.0
  %585 = vmatprep.subr.mxu0 0.0
  %586 = vmatpush1.msra.mxu0 0.0
  %587 = vmatprep.subr.mxu0 0.0
  %588 = vmatpush1.msra.mxu0 0.0
  %589 = vmatprep.subr.mxu0 0.0
  %590 = vmatpush1.msra.mxu0 0.0
  %591 = vmatprep.subr.mxu0 0.0
  %592 = vmatpush1.msra.mxu0 0.0
  %593 = vmatprep.subr.mxu0 0.0
  %594 = vmatpush1.msra.mxu0 0.0
  %595 = vmatprep.subr.mxu0 0.0
  %596 = vmatpush1.msra.mxu0 0.0
  %597 = vmatprep.subr.mxu0 0.0
  %598 = vmatpush1.msra.mxu0 0.0
  %599 = vmatprep.subr.mxu0 0.0
  %600 = vmatpush1.msra.mxu0 0.0
  %601 = vmatprep.subr.mxu0 0.0
  %602 = vmatpush1.msra.mxu0 0.0
  %603 = vmatprep.mubr.f32.mxu0 0.0
  %604 = vmatmul.mubr.f32.gmra.mrb[0].mxu0 %v537
  %v605 = vpop.f32.mrb[0].mxu0
  %v606 = vadd.f32 0.0, %v605
  %v607 = vpop.f32.mrb[0].mxu0
  %608 = vdwg.mxu0
  %v609 = vadd.f32 %v164, %v606
  %v610 = vmul.f32 %v609, 0.5
  %v611 = vtanh.pop %v610
  %v612 = vadd.f32 %v611, 1.0
  %v613 = vmul.f32 %v612, 0.5
  %v614 = vtanh.pop %v609
  %v615 = vmul.f32 %v613, %v527
  %617 = vrot.lane.b32.xlu0 %v614, 64
  %v618 = vpop.permute.xlu0 %617
  %v620 = vmul.f32 %v613, %v618
  %622 = vrot.lane.b32.xlu0 %v620, 32
  %v623 = vpop.permute.xlu0 %622
  %v625 = vadd.f32 %v615, %v623
  %v626 = vtanh.pop %v625
  %628 = vrot.lane.b32.xlu0 %v626, 64
  %v629 = vpop.permute.xlu0 %628
  %v631 = vmul.f32 %v613, %v629
  %633 = vrot.lane.b32.xlu0 %v631, 32
  %v634 = vpop.permute.xlu0 %633
  %v635 = vsel %vm62, %v634, 0
  %637 = vmatprep.subr.mxu0 0.0
  %638 = vmatpush1.msra.mxu0 %v35
  %639 = vmatprep.subr.mxu0 0.0
  %640 = vmatpush1.msra.mxu0 %v36
  %641 = vmatprep.subr.mxu0 0.0
  %642 = vmatpush1.msra.mxu0 %v37
  %643 = vmatprep.subr.mxu0 0.0
  %644 = vmatpush1.msra.mxu0 %v38
  %645 = vmatprep.subr.mxu0 0.0
  %646 = vmatpush1.msra.mxu0 0.0
  %647 = vmatprep.subr.mxu0 0.0
  %648 = vmatpush1.msra.mxu0 0.0
  %649 = vmatprep.subr.mxu0 0.0
  %650 = vmatpush1.msra.mxu0 0.0
  %651 = vmatprep.subr.mxu0 0.0
  %652 = vmatpush1.msra.mxu0 0.0
  %653 = vmatprep.subr.mxu0 0.0
  %654 = vmatpush1.msra.mxu0 0.0
  %655 = vmatprep.subr.mxu0 0.0
  %656 = vmatpush1.msra.mxu0 0.0
  %657 = vmatprep.subr.mxu0 0.0
  %658 = vmatpush1.msra.mxu0 0.0
  %659 = vmatprep.subr.mxu0 0.0
  %660 = vmatpush1.msra.mxu0 0.0
  %661 = vmatprep.subr.mxu0 0.0
  %662 = vmatpush1.msra.mxu0 0.0
  %663 = vmatprep.subr.mxu0 0.0
  %664 = vmatpush1.msra.mxu0 0.0
  %665 = vmatprep.subr.mxu0 0.0
  %666 = vmatpush1.msra.mxu0 0.0
  %667 = vmatprep.subr.mxu0 0.0
  %668 = vmatpush1.msra.mxu0 0.0
  %669 = vmatprep.subr.mxu0 0.0
  %670 = vmatpush1.msra.mxu0 0.0
  %671 = vmatprep.subr.mxu0 0.0
  %672 = vmatpush1.msra.mxu0 0.0
  %673 = vmatprep.subr.mxu0 0.0
  %674 = vmatpush1.msra.mxu0 0.0
  %675 = vmatprep.subr.mxu0 0.0
  %676 = vmatpush1.msra.mxu0 0.0
  %677 = vmatprep.subr.mxu0 0.0
  %678 = vmatpush1.msra.mxu0 0.0
  %679 = vmatprep.subr.mxu0 0.0
  %680 = vmatpush1.msra.mxu0 0.0
  %681 = vmatprep.subr.mxu0 0.0
  %682 = vmatpush1.msra.mxu0 0.0
  %683 = vmatprep.subr.mxu0 0.0
  %684 = vmatpush1.msra.mxu0 0.0
  %685 = vmatprep.subr.mxu0 0.0
  %686 = vmatpush1.msra.mxu0 0.0
  %687 = vmatprep.subr.mxu0 0.0
  %688 = vmatpush1.msra.mxu0 0.0
  %689 = vmatprep.subr.mxu0 0.0
  %690 = vmatpush1.msra.mxu0 0.0
  %691 = vmatprep.subr.mxu0 0.0
  %692 = vmatpush1.msra.mxu0 0.0
  %693 = vmatprep.subr.mxu0 0.0
  %694 = vmatpush1.msra.mxu0 0.0
  %695 = vmatprep.subr.mxu0 0.0
  %696 = vmatpush1.msra.mxu0 0.0
  %697 = vmatprep.subr.mxu0 0.0
  %698 = vmatpush1.msra.mxu0 0.0
  %699 = vmatprep.subr.mxu0 0.0
  %700 = vmatpush1.msra.mxu0 0.0
  %701 = vmatprep.mubr.f32.mxu0 0.0
  %702 = vmatmul.mubr.f32.gmra.mrb[0].mxu0 %v635
  %v703 = vpop.f32.mrb[0].mxu0
  %v704 = vadd.f32 0.0, %v703
  %v705 = vpop.f32.mrb[0].mxu0
  %706 = vdwg.mxu0
  %v707 = vadd.f32 %v169, %v704
  %v708 = vmul.f32 %v707, 0.5
  %v709 = vtanh.pop %v708
  %v710 = vadd.f32 %v709, 1.0
  %v711 = vmul.f32 %v710, 0.5
  %v712 = vtanh.pop %v707
  %v713 = vmul.f32 %v711, %v625
  %715 = vrot.lane.b32.xlu0 %v712, 64
  %v716 = vpop.permute.xlu0 %715
  %v718 = vmul.f32 %v711, %v716
  %720 = vrot.lane.b32.xlu0 %v718, 32
  %v721 = vpop.permute.xlu0 %720
  %v723 = vadd.f32 %v713, %v721
  %v724 = vtanh.pop %v723
  %726 = vrot.lane.b32.xlu0 %v724, 64
  %v727 = vpop.permute.xlu0 %726
  %v729 = vmul.f32 %v711, %v727
  %731 = vrot.lane.b32.xlu0 %v729, 32
  %v732 = vpop.permute.xlu0 %731
  %v733 = vsel %vm62, %v732, 0
  %735 = vmatprep.subr.mxu0 0.0
  %736 = vmatpush1.msra.mxu0 %v35
  %737 = vmatprep.subr.mxu0 0.0
  %738 = vmatpush1.msra.mxu0 %v36
  %739 = vmatprep.subr.mxu0 0.0
  %740 = vmatpush1.msra.mxu0 %v37
  %741 = vmatprep.subr.mxu0 0.0
  %742 = vmatpush1.msra.mxu0 %v38
  %743 = vmatprep.subr.mxu0 0.0
  %744 = vmatpush1.msra.mxu0 0.0
  %745 = vmatprep.subr.mxu0 0.0
  %746 = vmatpush1.msra.mxu0 0.0
  %747 = vmatprep.subr.mxu0 0.0
  %748 = vmatpush1.msra.mxu0 0.0
  %749 = vmatprep.subr.mxu0 0.0
  %750 = vmatpush1.msra.mxu0 0.0
  %751 = vmatprep.subr.mxu0 0.0
  %752 = vmatpush1.msra.mxu0 0.0
  %753 = vmatprep.subr.mxu0 0.0
  %754 = vmatpush1.msra.mxu0 0.0
  %755 = vmatprep.subr.mxu0 0.0
  %756 = vmatpush1.msra.mxu0 0.0
  %757 = vmatprep.subr.mxu0 0.0
  %758 = vmatpush1.msra.mxu0 0.0
  %759 = vmatprep.subr.mxu0 0.0
  %760 = vmatpush1.msra.mxu0 0.0
  %761 = vmatprep.subr.mxu0 0.0
  %762 = vmatpush1.msra.mxu0 0.0
  %763 = vmatprep.subr.mxu0 0.0
  %764 = vmatpush1.msra.mxu0 0.0
  %765 = vmatprep.subr.mxu0 0.0
  %766 = vmatpush1.msra.mxu0 0.0
  %767 = vmatprep.subr.mxu0 0.0
  %768 = vmatpush1.msra.mxu0 0.0
  %769 = vmatprep.subr.mxu0 0.0
  %770 = vmatpush1.msra.mxu0 0.0
  %771 = vmatprep.subr.mxu0 0.0
  %772 = vmatpush1.msra.mxu0 0.0
  %773 = vmatprep.subr.mxu0 0.0
  %774 = vmatpush1.msra.mxu0 0.0
  %775 = vmatprep.subr.mxu0 0.0
  %776 = vmatpush1.msra.mxu0 0.0
  %777 = vmatprep.subr.mxu0 0.0
  %778 = vmatpush1.msra.mxu0 0.0
  %779 = vmatprep.subr.mxu0 0.0
  %780 = vmatpush1.msra.mxu0 0.0
  %781 = vmatprep.subr.mxu0 0.0
  %782 = vmatpush1.msra.mxu0 0.0
  %783 = vmatprep.subr.mxu0 0.0
  %784 = vmatpush1.msra.mxu0 0.0
  %785 = vmatprep.subr.mxu0 0.0
  %786 = vmatpush1.msra.mxu0 0.0
  %787 = vmatprep.subr.mxu0 0.0
  %788 = vmatpush1.msra.mxu0 0.0
  %789 = vmatprep.subr.mxu0 0.0
  %790 = vmatpush1.msra.mxu0 0.0
  %791 = vmatprep.subr.mxu0 0.0
  %792 = vmatpush1.msra.mxu0 0.0
  %793 = vmatprep.subr.mxu0 0.0
  %794 = vmatpush1.msra.mxu0 0.0
  %795 = vmatprep.subr.mxu0 0.0
  %796 = vmatpush1.msra.mxu0 0.0
  %797 = vmatprep.subr.mxu0 0.0
  %798 = vmatpush1.msra.mxu0 0.0
  %799 = vmatprep.mubr.f32.mxu0 0.0
  %800 = vmatmul.mubr.f32.gmra.mrb[0].mxu0 %v733
  %v801 = vpop.f32.mrb[0].mxu0
  %v802 = vadd.f32 0.0, %v801
  %v803 = vpop.f32.mrb[0].mxu0
  %804 = vdwg.mxu0
  %v805 = vadd.f32 %v174, %v802
  %v806 = vmul.f32 %v805, 0.5
  %v807 = vtanh.pop %v806
  %v808 = vadd.f32 %v807, 1.0
  %v809 = vmul.f32 %v808, 0.5
  %v810 = vtanh.pop %v805
  %v811 = vmul.f32 %v809, %v723
  %813 = vrot.lane.b32.xlu0 %v810, 64
  %v814 = vpop.permute.xlu0 %813
  %v816 = vmul.f32 %v809, %v814
  %818 = vrot.lane.b32.xlu0 %v816, 32
  %v819 = vpop.permute.xlu0 %818
  %v821 = vadd.f32 %v811, %v819
  %v822 = vtanh.pop %v821
  %824 = vrot.lane.b32.xlu0 %v822, 64
  %v825 = vpop.permute.xlu0 %824
  %v827 = vmul.f32 %v809, %v825
  %829 = vrot.lane.b32.xlu0 %v827, 32
  %v830 = vpop.permute.xlu0 %829
  %v831 = vsel %vm62, %v830, 0
  %833 = vmatprep.subr.mxu0 0.0
  %834 = vmatpush1.msra.mxu0 %v35
  %835 = vmatprep.subr.mxu0 0.0
  %836 = vmatpush1.msra.mxu0 %v36
  %837 = vmatprep.subr.mxu0 0.0
  %838 = vmatpush1.msra.mxu0 %v37
  %839 = vmatprep.subr.mxu0 0.0
  %840 = vmatpush1.msra.mxu0 %v38
  %841 = vmatprep.subr.mxu0 0.0
  %842 = vmatpush1.msra.mxu0 0.0
  %843 = vmatprep.subr.mxu0 0.0
  %844 = vmatpush1.msra.mxu0 0.0
  %845 = vmatprep.subr.mxu0 0.0
  %846 = vmatpush1.msra.mxu0 0.0
  %847 = vmatprep.subr.mxu0 0.0
  %848 = vmatpush1.msra.mxu0 0.0
  %849 = vmatprep.subr.mxu0 0.0
  %850 = vmatpush1.msra.mxu0 0.0
  %851 = vmatprep.subr.mxu0 0.0
  %852 = vmatpush1.msra.mxu0 0.0
  %853 = vmatprep.subr.mxu0 0.0
  %854 = vmatpush1.msra.mxu0 0.0
  %855 = vmatprep.subr.mxu0 0.0
  %856 = vmatpush1.msra.mxu0 0.0
  %857 = vmatprep.subr.mxu0 0.0
  %858 = vmatpush1.msra.mxu0 0.0
  %859 = vmatprep.subr.mxu0 0.0
  %860 = vmatpush1.msra.mxu0 0.0
  %861 = vmatprep.subr.mxu0 0.0
  %862 = vmatpush1.msra.mxu0 0.0
  %863 = vmatprep.subr.mxu0 0.0
  %864 = vmatpush1.msra.mxu0 0.0
  %865 = vmatprep.subr.mxu0 0.0
  %866 = vmatpush1.msra.mxu0 0.0
  %867 = vmatprep.subr.mxu0 0.0
  %868 = vmatpush1.msra.mxu0 0.0
  %869 = vmatprep.subr.mxu0 0.0
  %870 = vmatpush1.msra.mxu0 0.0
  %871 = vmatprep.subr.mxu0 0.0
  %872 = vmatpush1.msra.mxu0 0.0
  %873 = vmatprep.subr.mxu0 0.0
  %874 = vmatpush1.msra.mxu0 0.0
  %875 = vmatprep.subr.mxu0 0.0
  %876 = vmatpush1.msra.mxu0 0.0
  %877 = vmatprep.subr.mxu0 0.0
  %878 = vmatpush1.msra.mxu0 0.0
  %879 = vmatprep.subr.mxu0 0.0
  %880 = vmatpush1.msra.mxu0 0.0
  %881 = vmatprep.subr.mxu0 0.0
  %882 = vmatpush1.msra.mxu0 0.0
  %883 = vmatprep.subr.mxu0 0.0
  %884 = vmatpush1.msra.mxu0 0.0
  %885 = vmatprep.subr.mxu0 0.0
  %886 = vmatpush1.msra.mxu0 0.0
  %887 = vmatprep.subr.mxu0 0.0
  %888 = vmatpush1.msra.mxu0 0.0
  %889 = vmatprep.subr.mxu0 0.0
  %890 = vmatpush1.msra.mxu0 0.0
  %891 = vmatprep.subr.mxu0 0.0
  %892 = vmatpush1.msra.mxu0 0.0
  %893 = vmatprep.subr.mxu0 0.0
  %894 = vmatpush1.msra.mxu0 0.0
  %895 = vmatprep.subr.mxu0 0.0
  %896 = vmatpush1.msra.mxu0 0.0
  %897 = vmatprep.mubr.f32.mxu0 0.0
  %898 = vmatmul.mubr.f32.gmra.mrb[0].mxu0 %v831
  %v899 = vpop.f32.mrb[0].mxu0
  %v900 = vadd.f32 0.0, %v899
  %v901 = vpop.f32.mrb[0].mxu0
  %902 = vdwg.mxu0
  %v903 = vadd.f32 %v179, %v900
  %v904 = vmul.f32 %v903, 0.5
  %v905 = vtanh.pop %v904
  %v906 = vadd.f32 %v905, 1.0
  %v907 = vmul.f32 %v906, 0.5
  %v908 = vtanh.pop %v903
  %v909 = vmul.f32 %v907, %v821
  %911 = vrot.lane.b32.xlu0 %v908, 64
  %v912 = vpop.permute.xlu0 %911
  %v914 = vmul.f32 %v907, %v912
  %916 = vrot.lane.b32.xlu0 %v914, 32
  %v917 = vpop.permute.xlu0 %916
  %v919 = vadd.f32 %v909, %v917
  %v920 = vtanh.pop %v919
  %922 = vrot.lane.b32.xlu0 %v920, 64
  %v923 = vpop.permute.xlu0 %922
  %v925 = vmul.f32 %v907, %v923
  %927 = vrot.lane.b32.xlu0 %v925, 32
  %v928 = vpop.permute.xlu0 %927
  %v929 = vsel %vm62, %v928, 0
  %931 = vmatprep.subr.mxu0 0.0
  %932 = vmatpush1.msra.mxu0 %v35
  %933 = vmatprep.subr.mxu0 0.0
  %934 = vmatpush1.msra.mxu0 %v36
  %935 = vmatprep.subr.mxu0 0.0
  %936 = vmatpush1.msra.mxu0 %v37
  %937 = vmatprep.subr.mxu0 0.0
  %938 = vmatpush1.msra.mxu0 %v38
  %939 = vmatprep.subr.mxu0 0.0
  %940 = vmatpush1.msra.mxu0 0.0
  %941 = vmatprep.subr.mxu0 0.0
  %942 = vmatpush1.msra.mxu0 0.0
  %943 = vmatprep.subr.mxu0 0.0
  %944 = vmatpush1.msra.mxu0 0.0
  %945 = vmatprep.subr.mxu0 0.0
  %946 = vmatpush1.msra.mxu0 0.0
  %947 = vmatprep.subr.mxu0 0.0
  %948 = vmatpush1.msra.mxu0 0.0
  %949 = vmatprep.subr.mxu0 0.0
  %950 = vmatpush1.msra.mxu0 0.0
  %951 = vmatprep.subr.mxu0 0.0
  %952 = vmatpush1.msra.mxu0 0.0
  %953 = vmatprep.subr.mxu0 0.0
  %954 = vmatpush1.msra.mxu0 0.0
  %955 = vmatprep.subr.mxu0 0.0
  %956 = vmatpush1.msra.mxu0 0.0
  %957 = vmatprep.subr.mxu0 0.0
  %958 = vmatpush1.msra.mxu0 0.0
  %959 = vmatprep.subr.mxu0 0.0
  %960 = vmatpush1.msra.mxu0 0.0
  %961 = vmatprep.subr.mxu0 0.0
  %962 = vmatpush1.msra.mxu0 0.0
  %963 = vmatprep.subr.mxu0 0.0
  %964 = vmatpush1.msra.mxu0 0.0
  %965 = vmatprep.subr.mxu0 0.0
  %966 = vmatpush1.msra.mxu0 0.0
  %967 = vmatprep.subr.mxu0 0.0
  %968 = vmatpush1.msra.mxu0 0.0
  %969 = vmatprep.subr.mxu0 0.0
  %970 = vmatpush1.msra.mxu0 0.0
  %971 = vmatprep.subr.mxu0 0.0
  %972 = vmatpush1.msra.mxu0 0.0
  %973 = vmatprep.subr.mxu0 0.0
  %974 = vmatpush1.msra.mxu0 0.0
  %975 = vmatprep.subr.mxu0 0.0
  %976 = vmatpush1.msra.mxu0 0.0
  %977 = vmatprep.subr.mxu0 0.0
  %978 = vmatpush1.msra.mxu0 0.0
  %979 = vmatprep.subr.mxu0 0.0
  %980 = vmatpush1.msra.mxu0 0.0
  %981 = vmatprep.subr.mxu0 0.0
  %982 = vmatpush1.msra.mxu0 0.0
  %983 = vmatprep.subr.mxu0 0.0
  %984 = vmatpush1.msra.mxu0 0.0
  %985 = vmatprep.subr.mxu0 0.0
  %986 = vmatpush1.msra.mxu0 0.0
  %987 = vmatprep.subr.mxu0 0.0
  %988 = vmatpush1.msra.mxu0 0.0
  %989 = vmatprep.subr.mxu0 0.0
  %990 = vmatpush1.msra.mxu0 0.0
  %991 = vmatprep.subr.mxu0 0.0
  %992 = vmatpush1.msra.mxu0 0.0
  %993 = vmatprep.subr.mxu0 0.0
  %994 = vmatpush1.msra.mxu0 0.0
  %995 = vmatprep.mubr.f32.mxu0 0.0
  %996 = vmatmul.mubr.f32.gmra.mrb[0].mxu0 %v929
  %v997 = vpop.f32.mrb[0].mxu0
  %v998 = vadd.f32 0.0, %v997
  %v999 = vpop.f32.mrb[0].mxu0
  %1000 = vdwg.mxu0
  %v1001 = vadd.f32 %v184, %v998
  %v1002 = vmul.f32 %v1001, 0.5
  %v1003 = vtanh.pop %v1002
  %v1004 = vadd.f32 %v1003, 1.0
  %v1005 = vmul.f32 %v1004, 0.5
  %v1006 = vtanh.pop %v1001
  %v1007 = vmul.f32 %v1005, %v919
  %1009 = vrot.lane.b32.xlu0 %v1006, 64
  %v1010 = vpop.permute.xlu0 %1009
  %v1012 = vmul.f32 %v1005, %v1010
  %1014 = vrot.lane.b32.xlu0 %v1012, 32
  %v1015 = vpop.permute.xlu0 %1014
  %v1017 = vadd.f32 %v1007, %v1015
  %v1018 = vtanh.pop %v1017
  %1020 = vrot.lane.b32.xlu0 %v1018, 64
  %v1021 = vpop.permute.xlu0 %1020
  %v1023 = vmul.f32 %v1005, %v1021
  %1025 = vrot.lane.b32.xlu0 %v1023, 32
  %v1026 = vpop.permute.xlu0 %1025
  %v1027 = vsel %vm62, %v1026, 0
  %1029 = vmatprep.subr.mxu0 0.0
  %1030 = vmatpush1.msra.mxu0 %v35
  %1031 = vmatprep.subr.mxu0 0.0
  %1032 = vmatpush1.msra.mxu0 %v36
  %1033 = vmatprep.subr.mxu0 0.0
  %1034 = vmatpush1.msra.mxu0 %v37
  %1035 = vmatprep.subr.mxu0 0.0
  %1036 = vmatpush1.msra.mxu0 %v38
  %1037 = vmatprep.subr.mxu0 0.0
  %1038 = vmatpush1.msra.mxu0 0.0
  %1039 = vmatprep.subr.mxu0 0.0
  %1040 = vmatpush1.msra.mxu0 0.0
  %1041 = vmatprep.subr.mxu0 0.0
  %1042 = vmatpush1.msra.mxu0 0.0
  %1043 = vmatprep.subr.mxu0 0.0
  %1044 = vmatpush1.msra.mxu0 0.0
  %1045 = vmatprep.subr.mxu0 0.0
  %1046 = vmatpush1.msra.mxu0 0.0
  %1047 = vmatprep.subr.mxu0 0.0
  %1048 = vmatpush1.msra.mxu0 0.0
  %1049 = vmatprep.subr.mxu0 0.0
  %1050 = vmatpush1.msra.mxu0 0.0
  %1051 = vmatprep.subr.mxu0 0.0
  %1052 = vmatpush1.msra.mxu0 0.0
  %1053 = vmatprep.subr.mxu0 0.0
  %1054 = vmatpush1.msra.mxu0 0.0
  %1055 = vmatprep.subr.mxu0 0.0
  %1056 = vmatpush1.msra.mxu0 0.0
  %1057 = vmatprep.subr.mxu0 0.0
  %1058 = vmatpush1.msra.mxu0 0.0
  %1059 = vmatprep.subr.mxu0 0.0
  %1060 = vmatpush1.msra.mxu0 0.0
  %1061 = vmatprep.subr.mxu0 0.0
  %1062 = vmatpush1.msra.mxu0 0.0
  %1063 = vmatprep.subr.mxu0 0.0
  %1064 = vmatpush1.msra.mxu0 0.0
  %1065 = vmatprep.subr.mxu0 0.0
  %1066 = vmatpush1.msra.mxu0 0.0
  %1067 = vmatprep.subr.mxu0 0.0
  %1068 = vmatpush1.msra.mxu0 0.0
  %1069 = vmatprep.subr.mxu0 0.0
  %1070 = vmatpush1.msra.mxu0 0.0
  %1071 = vmatprep.subr.mxu0 0.0
  %1072 = vmatpush1.msra.mxu0 0.0
  %1073 = vmatprep.subr.mxu0 0.0
  %1074 = vmatpush1.msra.mxu0 0.0
  %1075 = vmatprep.subr.mxu0 0.0
  %1076 = vmatpush1.msra.mxu0 0.0
  %1077 = vmatprep.subr.mxu0 0.0
  %1078 = vmatpush1.msra.mxu0 0.0
  %1079 = vmatprep.subr.mxu0 0.0
  %1080 = vmatpush1.msra.mxu0 0.0
  %1081 = vmatprep.subr.mxu0 0.0
  %1082 = vmatpush1.msra.mxu0 0.0
  %1083 = vmatprep.subr.mxu0 0.0
  %1084 = vmatpush1.msra.mxu0 0.0
  %1085 = vmatprep.subr.mxu0 0.0
  %1086 = vmatpush1.msra.mxu0 0.0
  %1087 = vmatprep.subr.mxu0 0.0
  %1088 = vmatpush1.msra.mxu0 0.0
  %1089 = vmatprep.subr.mxu0 0.0
  %1090 = vmatpush1.msra.mxu0 0.0
  %1091 = vmatprep.subr.mxu0 0.0
  %1092 = vmatpush1.msra.mxu0 0.0
  %1093 = vmatprep.mubr.f32.mxu0 0.0
  %1094 = vmatmul.mubr.f32.gmra.mrb[0].mxu0 %v1027
  %v1095 = vpop.f32.mrb[0].mxu0
  %v1096 = vadd.f32 0.0, %v1095
  %v1097 = vpop.f32.mrb[0].mxu0
  %1098 = vdwg.mxu0
  %v1099 = vadd.f32 %v189, %v1096
  %v1100 = vmul.f32 %v1099, 0.5
  %v1101 = vtanh.pop %v1100
  %v1102 = vadd.f32 %v1101, 1.0
  %v1103 = vmul.f32 %v1102, 0.5
  %v1104 = vtanh.pop %v1099
  %v1105 = vmul.f32 %v1103, %v1017
  %1107 = vrot.lane.b32.xlu0 %v1104, 64
  %v1108 = vpop.permute.xlu0 %1107
  %v1110 = vmul.f32 %v1103, %v1108
  %1112 = vrot.lane.b32.xlu0 %v1110, 32
  %v1113 = vpop.permute.xlu0 %1112
  %v1115 = vadd.f32 %v1105, %v1113
  %v1116 = vtanh.pop %v1115
  %1118 = vrot.lane.b32.xlu0 %v1116, 64
  %v1119 = vpop.permute.xlu0 %1118
  %v1121 = vmul.f32 %v1103, %v1119
  %1123 = vrot.lane.b32.xlu0 %v1121, 32
  %v1124 = vpop.permute.xlu0 %1123
  %v1125 = vsel %vm62, %v1124, 0
  %1127 = vmatprep.subr.mxu0 0.0
  %1128 = vmatpush1.msra.mxu0 %v39
  %1129 = vmatprep.subr.mxu0 0.0
  %1130 = vmatpush1.msra.mxu0 %v40
  %1131 = vmatprep.subr.mxu0 0.0
  %1132 = vmatpush1.msra.mxu0 %v41
  %1133 = vmatprep.subr.mxu0 0.0
  %1134 = vmatpush1.msra.mxu0 %v42
  %1135 = vmatprep.subr.mxu0 0.0
  %1136 = vmatpush1.msra.mxu0 0.0
  %1137 = vmatprep.subr.mxu0 0.0
  %1138 = vmatpush1.msra.mxu0 0.0
  %1139 = vmatprep.subr.mxu0 0.0
  %1140 = vmatpush1.msra.mxu0 0.0
  %1141 = vmatprep.subr.mxu0 0.0
  %1142 = vmatpush1.msra.mxu0 0.0
  %1143 = vmatprep.subr.mxu0 0.0
  %1144 = vmatpush1.msra.mxu0 0.0
  %1145 = vmatprep.subr.mxu0 0.0
  %1146 = vmatpush1.msra.mxu0 0.0
  %1147 = vmatprep.subr.mxu0 0.0
  %1148 = vmatpush1.msra.mxu0 0.0
  %1149 = vmatprep.subr.mxu0 0.0
  %1150 = vmatpush1.msra.mxu0 0.0
  %1151 = vmatprep.subr.mxu0 0.0
  %1152 = vmatpush1.msra.mxu0 0.0
  %1153 = vmatprep.subr.mxu0 0.0
  %1154 = vmatpush1.msra.mxu0 0.0
  %1155 = vmatprep.subr.mxu0 0.0
  %1156 = vmatpush1.msra.mxu0 0.0
  %1157 = vmatprep.subr.mxu0 0.0
  %1158 = vmatpush1.msra.mxu0 0.0
  %1159 = vmatprep.subr.mxu0 0.0
  %1160 = vmatpush1.msra.mxu0 0.0
  %1161 = vmatprep.subr.mxu0 0.0
  %1162 = vmatpush1.msra.mxu0 0.0
  %1163 = vmatprep.subr.mxu0 0.0
  %1164 = vmatpush1.msra.mxu0 0.0
  %1165 = vmatprep.subr.mxu0 0.0
  %1166 = vmatpush1.msra.mxu0 0.0
  %1167 = vmatprep.subr.mxu0 0.0
  %1168 = vmatpush1.msra.mxu0 0.0
  %1169 = vmatprep.subr.mxu0 0.0
  %1170 = vmatpush1.msra.mxu0 0.0
  %1171 = vmatprep.subr.mxu0 0.0
  %1172 = vmatpush1.msra.mxu0 0.0
  %1173 = vmatprep.subr.mxu0 0.0
  %1174 = vmatpush1.msra.mxu0 0.0
  %1175 = vmatprep.subr.mxu0 0.0
  %1176 = vmatpush1.msra.mxu0 0.0
  %1177 = vmatprep.subr.mxu0 0.0
  %1178 = vmatpush1.msra.mxu0 0.0
  %1179 = vmatprep.subr.mxu0 0.0
  %1180 = vmatpush1.msra.mxu0 0.0
  %1181 = vmatprep.subr.mxu0 0.0
  %1182 = vmatpush1.msra.mxu0 0.0
  %1183 = vmatprep.subr.mxu0 0.0
  %1184 = vmatpush1.msra.mxu0 0.0
  %1185 = vmatprep.subr.mxu0 0.0
  %1186 = vmatpush1.msra.mxu0 0.0
  %1187 = vmatprep.subr.mxu0 0.0
  %1188 = vmatpush1.msra.mxu0 0.0
  %1189 = vmatprep.subr.mxu0 0.0
  %1190 = vmatpush1.msra.mxu0 0.0
  %1191 = vmatprep.mubr.f32.mxu0 0.0
  %1192 = vmatmul.mubr.f32.gmra.mrb[0].mxu0 %v1125
  %v1193 = vpop.f32.mrb[0].mxu0
  %v1194 = vadd.f32 0.0, %v1193
  %v1195 = vpop.f32.mrb[0].mxu0
  %1196 = vdwg.mxu0
  %v1197 = vadd.f32 %v302, %v1194
  %v1198 = vmul.f32 %v1197, 0.5
  %v1199 = vtanh.pop %v1198
  %v1200 = vadd.f32 %v1199, 1.0
  %v1201 = vmul.f32 %v1200, 0.5
  %v1202 = vtanh.pop %v1197
  %v1203 = vmul.f32 %v1201, %v1115
  %1205 = vrot.lane.b32.xlu0 %v1202, 64
  %v1206 = vpop.permute.xlu0 %1205
  %v1208 = vmul.f32 %v1201, %v1206
  %1210 = vrot.lane.b32.xlu0 %v1208, 32
  %v1211 = vpop.permute.xlu0 %1210
  %v1213 = vadd.f32 %v1203, %v1211
  %v1214 = vtanh.pop %v1213
  %1216 = vrot.lane.b32.xlu0 %v1214, 64
  %v1217 = vpop.permute.xlu0 %1216
  %v1219 = vmul.f32 %v1201, %v1217
  %1221 = vrot.lane.b32.xlu0 %v1219, 32
  %v1222 = vpop.permute.xlu0 %1221
  %v1223 = vsel %vm62, %v1222, 0
  %1225 = vmatprep.subr.mxu0 0.0
  %1226 = vmatpush1.msra.mxu0 %v39
  %1227 = vmatprep.subr.mxu0 0.0
  %1228 = vmatpush1.msra.mxu0 %v40
  %1229 = vmatprep.subr.mxu0 0.0
  %1230 = vmatpush1.msra.mxu0 %v41
  %1231 = vmatprep.subr.mxu0 0.0
  %1232 = vmatpush1.msra.mxu0 %v42
  %1233 = vmatprep.subr.mxu0 0.0
  %1234 = vmatpush1.msra.mxu0 0.0
  %1235 = vmatprep.subr.mxu0 0.0
  %1236 = vmatpush1.msra.mxu0 0.0
  %1237 = vmatprep.subr.mxu0 0.0
  %1238 = vmatpush1.msra.mxu0 0.0
  %1239 = vmatprep.subr.mxu0 0.0
  %1240 = vmatpush1.msra.mxu0 0.0
  %1241 = vmatprep.subr.mxu0 0.0
  %1242 = vmatpush1.msra.mxu0 0.0
  %1243 = vmatprep.subr.mxu0 0.0
  %1244 = vmatpush1.msra.mxu0 0.0
  %1245 = vmatprep.subr.mxu0 0.0
  %1246 = vmatpush1.msra.mxu0 0.0
  %1247 = vmatprep.subr.mxu0 0.0
  %1248 = vmatpush1.msra.mxu0 0.0
  %1249 = vmatprep.subr.mxu0 0.0
  %1250 = vmatpush1.msra.mxu0 0.0
  %1251 = vmatprep.subr.mxu0 0.0
  %1252 = vmatpush1.msra.mxu0 0.0
  %1253 = vmatprep.subr.mxu0 0.0
  %1254 = vmatpush1.msra.mxu0 0.0
  %1255 = vmatprep.subr.mxu0 0.0
  %1256 = vmatpush1.msra.mxu0 0.0
  %1257 = vmatprep.subr.mxu0 0.0
  %1258 = vmatpush1.msra.mxu0 0.0
  %1259 = vmatprep.subr.mxu0 0.0
  %1260 = vmatpush1.msra.mxu0 0.0
  %1261 = vmatprep.subr.mxu0 0.0
  %1262 = vmatpush1.msra.mxu0 0.0
  %1263 = vmatprep.subr.mxu0 0.0
  %1264 = vmatpush1.msra.mxu0 0.0
  %1265 = vmatprep.subr.mxu0 0.0
  %1266 = vmatpush1.msra.mxu0 0.0
  %1267 = vmatprep.subr.mxu0 0.0
  %1268 = vmatpush1.msra.mxu0 0.0
  %1269 = vmatprep.subr.mxu0 0.0
  %1270 = vmatpush1.msra.mxu0 0.0
  %1271 = vmatprep.subr.mxu0 0.0
  %1272 = vmatpush1.msra.mxu0 0.0
  %1273 = vmatprep.subr.mxu0 0.0
  %1274 = vmatpush1.msra.mxu0 0.0
  %1275 = vmatprep.subr.mxu0 0.0
  %1276 = vmatpush1.msra.mxu0 0.0
  %1277 = vmatprep.subr.mxu0 0.0
  %1278 = vmatpush1.msra.mxu0 0.0
  %1279 = vmatprep.subr.mxu0 0.0
  %1280 = vmatpush1.msra.mxu0 0.0
  %1281 = vmatprep.subr.mxu0 0.0
  %1282 = vmatpush1.msra.mxu0 0.0
  %1283 = vmatprep.subr.mxu0 0.0
  %1284 = vmatpush1.msra.mxu0 0.0
  %1285 = vmatprep.subr.mxu0 0.0
  %1286 = vmatpush1.msra.mxu0 0.0
  %1287 = vmatprep.subr.mxu0 0.0
  %1288 = vmatpush1.msra.mxu0 0.0
  %1289 = vmatprep.mubr.f32.mxu0 0.0
  %1290 = vmatmul.mubr.f32.gmra.mrb[0].mxu0 %v1223
  %v1291 = vpop.f32.mrb[0].mxu0
  %v1292 = vadd.f32 0.0, %v1291
  %v1293 = vpop.f32.mrb[0].mxu0
  %1294 = vdwg.mxu0
  %v1295 = vadd.f32 %v307, %v1292
  %v1296 = vmul.f32 %v1295, 0.5
  %v1297 = vtanh.pop %v1296
  %v1298 = vadd.f32 %v1297, 1.0
  %v1299 = vmul.f32 %v1298, 0.5
  %v1300 = vtanh.pop %v1295
  %v1301 = vmul.f32 %v1299, %v1213
  %1303 = vrot.lane.b32.xlu0 %v1300, 64
  %v1304 = vpop.permute.xlu0 %1303
  %v1306 = vmul.f32 %v1299, %v1304
  %1308 = vrot.lane.b32.xlu0 %v1306, 32
  %v1309 = vpop.permute.xlu0 %1308
  %v1311 = vadd.f32 %v1301, %v1309
  %v1312 = vtanh.pop %v1311
  %1314 = vrot.lane.b32.xlu0 %v1312, 64
  %v1315 = vpop.permute.xlu0 %1314
  %v1317 = vmul.f32 %v1299, %v1315
  %1319 = vrot.lane.b32.xlu0 %v1317, 32
  %v1320 = vpop.permute.xlu0 %1319
  %v1321 = vsel %vm62, %v1320, 0
  %1323 = vmatprep.subr.mxu0 0.0
  %1324 = vmatpush1.msra.mxu0 %v39
  %1325 = vmatprep.subr.mxu0 0.0
  %1326 = vmatpush1.msra.mxu0 %v40
  %1327 = vmatprep.subr.mxu0 0.0
  %1328 = vmatpush1.msra.mxu0 %v41
  %1329 = vmatprep.subr.mxu0 0.0
  %1330 = vmatpush1.msra.mxu0 %v42
  %1331 = vmatprep.subr.mxu0 0.0
  %1332 = vmatpush1.msra.mxu0 0.0
  %1333 = vmatprep.subr.mxu0 0.0
  %1334 = vmatpush1.msra.mxu0 0.0
  %1335 = vmatprep.subr.mxu0 0.0
  %1336 = vmatpush1.msra.mxu0 0.0
  %1337 = vmatprep.subr.mxu0 0.0
  %1338 = vmatpush1.msra.mxu0 0.0
  %1339 = vmatprep.subr.mxu0 0.0
  %1340 = vmatpush1.msra.mxu0 0.0
  %1341 = vmatprep.subr.mxu0 0.0
  %1342 = vmatpush1.msra.mxu0 0.0
  %1343 = vmatprep.subr.mxu0 0.0
  %1344 = vmatpush1.msra.mxu0 0.0
  %1345 = vmatprep.subr.mxu0 0.0
  %1346 = vmatpush1.msra.mxu0 0.0
  %1347 = vmatprep.subr.mxu0 0.0
  %1348 = vmatpush1.msra.mxu0 0.0
  %1349 = vmatprep.subr.mxu0 0.0
  %1350 = vmatpush1.msra.mxu0 0.0
  %1351 = vmatprep.subr.mxu0 0.0
  %1352 = vmatpush1.msra.mxu0 0.0
  %1353 = vmatprep.subr.mxu0 0.0
  %1354 = vmatpush1.msra.mxu0 0.0
  %1355 = vmatprep.subr.mxu0 0.0
  %1356 = vmatpush1.msra.mxu0 0.0
  %1357 = vmatprep.subr.mxu0 0.0
  %1358 = vmatpush1.msra.mxu0 0.0
  %1359 = vmatprep.subr.mxu0 0.0
  %1360 = vmatpush1.msra.mxu0 0.0
  %1361 = vmatprep.subr.mxu0 0.0
  %1362 = vmatpush1.msra.mxu0 0.0
  %1363 = vmatprep.subr.mxu0 0.0
  %1364 = vmatpush1.msra.mxu0 0.0
  %1365 = vmatprep.subr.mxu0 0.0
  %1366 = vmatpush1.msra.mxu0 0.0
  %1367 = vmatprep.subr.mxu0 0.0
  %1368 = vmatpush1.msra.mxu0 0.0
  %1369 = vmatprep.subr.mxu0 0.0
  %1370 = vmatpush1.msra.mxu0 0.0
  %1371 = vmatprep.subr.mxu0 0.0
  %1372 = vmatpush1.msra.mxu0 0.0
  %1373 = vmatprep.subr.mxu0 0.0
  %1374 = vmatpush1.msra.mxu0 0.0
  %1375 = vmatprep.subr.mxu0 0.0
  %1376 = vmatpush1.msra.mxu0 0.0
  %1377 = vmatprep.subr.mxu0 0.0
  %1378 = vmatpush1.msra.mxu0 0.0
  %1379 = vmatprep.subr.mxu0 0.0
  %1380 = vmatpush1.msra.mxu0 0.0
  %1381 = vmatprep.subr.mxu0 0.0
  %1382 = vmatpush1.msra.mxu0 0.0
  %1383 = vmatprep.subr.mxu0 0.0
  %1384 = vmatpush1.msra.mxu0 0.0
  %1385 = vmatprep.subr.mxu0 0.0
  %1386 = vmatpush1.msra.mxu0 0.0
  %1387 = vmatprep.mubr.f32.mxu0 0.0
  %1388 = vmatmul.mubr.f32.gmra.mrb[0].mxu0 %v1321
  %v1389 = vpop.f32.mrb[0].mxu0
  %v1390 = vadd.f32 0.0, %v1389
  %v1391 = vpop.f32.mrb[0].mxu0
  %1392 = vdwg.mxu0
  %v1393 = vadd.f32 %v312, %v1390
  %v1394 = vmul.f32 %v1393, 0.5
  %v1395 = vtanh.pop %v1394
  %v1396 = vadd.f32 %v1395, 1.0
  %v1397 = vmul.f32 %v1396, 0.5
  %v1398 = vtanh.pop %v1393
  %v1399 = vmul.f32 %v1397, %v1311
  %1401 = vrot.lane.b32.xlu0 %v1398, 64
  %v1402 = vpop.permute.xlu0 %1401
  %v1404 = vmul.f32 %v1397, %v1402
  %1406 = vrot.lane.b32.xlu0 %v1404, 32
  %v1407 = vpop.permute.xlu0 %1406
  %v1409 = vadd.f32 %v1399, %v1407
  %v1410 = vtanh.pop %v1409
  %1412 = vrot.lane.b32.xlu0 %v1410, 64
  %v1413 = vpop.permute.xlu0 %1412
  %v1415 = vmul.f32 %v1397, %v1413
  %1417 = vrot.lane.b32.xlu0 %v1415, 32
  %v1418 = vpop.permute.xlu0 %1417
  %v1419 = vsel %vm62, %v1418, 0
  %1421 = vmatprep.subr.mxu0 0.0
  %1422 = vmatpush1.msra.mxu0 %v39
  %1423 = vmatprep.subr.mxu0 0.0
  %1424 = vmatpush1.msra.mxu0 %v40
  %1425 = vmatprep.subr.mxu0 0.0
  %1426 = vmatpush1.msra.mxu0 %v41
  %1427 = vmatprep.subr.mxu0 0.0
  %1428 = vmatpush1.msra.mxu0 %v42
  %1429 = vmatprep.subr.mxu0 0.0
  %1430 = vmatpush1.msra.mxu0 0.0
  %1431 = vmatprep.subr.mxu0 0.0
  %1432 = vmatpush1.msra.mxu0 0.0
  %1433 = vmatprep.subr.mxu0 0.0
  %1434 = vmatpush1.msra.mxu0 0.0
  %1435 = vmatprep.subr.mxu0 0.0
  %1436 = vmatpush1.msra.mxu0 0.0
  %1437 = vmatprep.subr.mxu0 0.0
  %1438 = vmatpush1.msra.mxu0 0.0
  %1439 = vmatprep.subr.mxu0 0.0
  %1440 = vmatpush1.msra.mxu0 0.0
  %1441 = vmatprep.subr.mxu0 0.0
  %1442 = vmatpush1.msra.mxu0 0.0
  %1443 = vmatprep.subr.mxu0 0.0
  %1444 = vmatpush1.msra.mxu0 0.0
  %1445 = vmatprep.subr.mxu0 0.0
  %1446 = vmatpush1.msra.mxu0 0.0
  %1447 = vmatprep.subr.mxu0 0.0
  %1448 = vmatpush1.msra.mxu0 0.0
  %1449 = vmatprep.subr.mxu0 0.0
  %1450 = vmatpush1.msra.mxu0 0.0
  %1451 = vmatprep.subr.mxu0 0.0
  %1452 = vmatpush1.msra.mxu0 0.0
  %1453 = vmatprep.subr.mxu0 0.0
  %1454 = vmatpush1.msra.mxu0 0.0
  %1455 = vmatprep.subr.mxu0 0.0
  %1456 = vmatpush1.msra.mxu0 0.0
  %1457 = vmatprep.subr.mxu0 0.0
  %1458 = vmatpush1.msra.mxu0 0.0
  %1459 = vmatprep.subr.mxu0 0.0
  %1460 = vmatpush1.msra.mxu0 0.0
  %1461 = vmatprep.subr.mxu0 0.0
  %1462 = vmatpush1.msra.mxu0 0.0
  %1463 = vmatprep.subr.mxu0 0.0
  %1464 = vmatpush1.msra.mxu0 0.0
  %1465 = vmatprep.subr.mxu0 0.0
  %1466 = vmatpush1.msra.mxu0 0.0
  %1467 = vmatprep.subr.mxu0 0.0
  %1468 = vmatpush1.msra.mxu0 0.0
  %1469 = vmatprep.subr.mxu0 0.0
  %1470 = vmatpush1.msra.mxu0 0.0
  %1471 = vmatprep.subr.mxu0 0.0
  %1472 = vmatpush1.msra.mxu0 0.0
  %1473 = vmatprep.subr.mxu0 0.0
  %1474 = vmatpush1.msra.mxu0 0.0
  %1475 = vmatprep.subr.mxu0 0.0
  %1476 = vmatpush1.msra.mxu0 0.0
  %1477 = vmatprep.subr.mxu0 0.0
  %1478 = vmatpush1.msra.mxu0 0.0
  %1479 = vmatprep.subr.mxu0 0.0
  %1480 = vmatpush1.msra.mxu0 0.0
  %1481 = vmatprep.subr.mxu0 0.0
  %1482 = vmatpush1.msra.mxu0 0.0
  %1483 = vmatprep.subr.mxu0 0.0
  %1484 = vmatpush1.msra.mxu0 0.0
  %1485 = vmatprep.mubr.f32.mxu0 0.0
  %1486 = vmatmul.mubr.f32.gmra.mrb[0].mxu0 %v1419
  %v1487 = vpop.f32.mrb[0].mxu0
  %v1488 = vadd.f32 0.0, %v1487
  %v1489 = vpop.f32.mrb[0].mxu0
  %1490 = vdwg.mxu0
  %v1491 = vadd.f32 %v317, %v1488
  %v1492 = vmul.f32 %v1491, 0.5
  %v1493 = vtanh.pop %v1492
  %v1494 = vadd.f32 %v1493, 1.0
  %v1495 = vmul.f32 %v1494, 0.5
  %v1496 = vtanh.pop %v1491
  %v1497 = vmul.f32 %v1495, %v1409
  %1499 = vrot.lane.b32.xlu0 %v1496, 64
  %v1500 = vpop.permute.xlu0 %1499
  %v1502 = vmul.f32 %v1495, %v1500
  %1504 = vrot.lane.b32.xlu0 %v1502, 32
  %v1505 = vpop.permute.xlu0 %1504
  %v1507 = vadd.f32 %v1497, %v1505
  %v1508 = vtanh.pop %v1507
  %1510 = vrot.lane.b32.xlu0 %v1508, 64
  %v1511 = vpop.permute.xlu0 %1510
  %v1513 = vmul.f32 %v1495, %v1511
  %1515 = vrot.lane.b32.xlu0 %v1513, 32
  %v1516 = vpop.permute.xlu0 %1515
  %v1517 = vsel %vm62, %v1516, 0
  %1519 = vmatprep.subr.mxu0 0.0
  %1520 = vmatpush1.msra.mxu0 %v39
  %1521 = vmatprep.subr.mxu0 0.0
  %1522 = vmatpush1.msra.mxu0 %v40
  %1523 = vmatprep.subr.mxu0 0.0
  %1524 = vmatpush1.msra.mxu0 %v41
  %1525 = vmatprep.subr.mxu0 0.0
  %1526 = vmatpush1.msra.mxu0 %v42
  %1527 = vmatprep.subr.mxu0 0.0
  %1528 = vmatpush1.msra.mxu0 0.0
  %1529 = vmatprep.subr.mxu0 0.0
  %1530 = vmatpush1.msra.mxu0 0.0
  %1531 = vmatprep.subr.mxu0 0.0
  %1532 = vmatpush1.msra.mxu0 0.0
  %1533 = vmatprep.subr.mxu0 0.0
  %1534 = vmatpush1.msra.mxu0 0.0
  %1535 = vmatprep.subr.mxu0 0.0
  %1536 = vmatpush1.msra.mxu0 0.0
  %1537 = vmatprep.subr.mxu0 0.0
  %1538 = vmatpush1.msra.mxu0 0.0
  %1539 = vmatprep.subr.mxu0 0.0
  %1540 = vmatpush1.msra.mxu0 0.0
  %1541 = vmatprep.subr.mxu0 0.0
  %1542 = vmatpush1.msra.mxu0 0.0
  %1543 = vmatprep.subr.mxu0 0.0
  %1544 = vmatpush1.msra.mxu0 0.0
  %1545 = vmatprep.subr.mxu0 0.0
  %1546 = vmatpush1.msra.mxu0 0.0
  %1547 = vmatprep.subr.mxu0 0.0
  %1548 = vmatpush1.msra.mxu0 0.0
  %1549 = vmatprep.subr.mxu0 0.0
  %1550 = vmatpush1.msra.mxu0 0.0
  %1551 = vmatprep.subr.mxu0 0.0
  %1552 = vmatpush1.msra.mxu0 0.0
  %1553 = vmatprep.subr.mxu0 0.0
  %1554 = vmatpush1.msra.mxu0 0.0
  %1555 = vmatprep.subr.mxu0 0.0
  %1556 = vmatpush1.msra.mxu0 0.0
  %1557 = vmatprep.subr.mxu0 0.0
  %1558 = vmatpush1.msra.mxu0 0.0
  %1559 = vmatprep.subr.mxu0 0.0
  %1560 = vmatpush1.msra.mxu0 0.0
  %1561 = vmatprep.subr.mxu0 0.0
  %1562 = vmatpush1.msra.mxu0 0.0
  %1563 = vmatprep.subr.mxu0 0.0
  %1564 = vmatpush1.msra.mxu0 0.0
  %1565 = vmatprep.subr.mxu0 0.0
  %1566 = vmatpush1.msra.mxu0 0.0
  %1567 = vmatprep.subr.mxu0 0.0
  %1568 = vmatpush1.msra.mxu0 0.0
  %1569 = vmatprep.subr.mxu0 0.0
  %1570 = vmatpush1.msra.mxu0 0.0
  %1571 = vmatprep.subr.mxu0 0.0
  %1572 = vmatpush1.msra.mxu0 0.0
  %1573 = vmatprep.subr.mxu0 0.0
  %1574 = vmatpush1.msra.mxu0 0.0
  %1575 = vmatprep.subr.mxu0 0.0
  %1576 = vmatpush1.msra.mxu0 0.0
  %1577 = vmatprep.subr.mxu0 0.0
  %1578 = vmatpush1.msra.mxu0 0.0
  %1579 = vmatprep.subr.mxu0 0.0
  %1580 = vmatpush1.msra.mxu0 0.0
  %1581 = vmatprep.subr.mxu0 0.0
  %1582 = vmatpush1.msra.mxu0 0.0
  %1583 = vmatprep.mubr.f32.mxu0 0.0
  %1584 = vmatmul.mubr.f32.gmra.mrb[0].mxu0 %v1517
  %v1585 = vpop.f32.mrb[0].mxu0
  %v1586 = vadd.f32 0.0, %v1585
  %v1587 = vpop.f32.mrb[0].mxu0
  %1588 = vdwg.mxu0
  %v1589 = vadd.f32 %v322, %v1586
  %v1590 = vmul.f32 %v1589, 0.5
  %v1591 = vtanh.pop %v1590
  %v1592 = vadd.f32 %v1591, 1.0
  %v1593 = vmul.f32 %v1592, 0.5
  %v1594 = vtanh.pop %v1589
  %v1595 = vmul.f32 %v1593, %v1507
  %1597 = vrot.lane.b32.xlu0 %v1594, 64
  %v1598 = vpop.permute.xlu0 %1597
  %v1600 = vmul.f32 %v1593, %v1598
  %1602 = vrot.lane.b32.xlu0 %v1600, 32
  %v1603 = vpop.permute.xlu0 %1602
  %v1605 = vadd.f32 %v1595, %v1603
  %v1606 = vtanh.pop %v1605
  %1608 = vrot.lane.b32.xlu0 %v1606, 64
  %v1609 = vpop.permute.xlu0 %1608
  %v1611 = vmul.f32 %v1593, %v1609
  %1613 = vrot.lane.b32.xlu0 %v1611, 32
  %v1614 = vpop.permute.xlu0 %1613
  %v1615 = vsel %vm62, %v1614, 0
  %1617 = vmatprep.subr.mxu0 0.0
  %1618 = vmatpush1.msra.mxu0 %v39
  %1619 = vmatprep.subr.mxu0 0.0
  %1620 = vmatpush1.msra.mxu0 %v40
  %1621 = vmatprep.subr.mxu0 0.0
  %1622 = vmatpush1.msra.mxu0 %v41
  %1623 = vmatprep.subr.mxu0 0.0
  %1624 = vmatpush1.msra.mxu0 %v42
  %1625 = vmatprep.subr.mxu0 0.0
  %1626 = vmatpush1.msra.mxu0 0.0
  %1627 = vmatprep.subr.mxu0 0.0
  %1628 = vmatpush1.msra.mxu0 0.0
  %1629 = vmatprep.subr.mxu0 0.0
  %1630 = vmatpush1.msra.mxu0 0.0
  %1631 = vmatprep.subr.mxu0 0.0
  %1632 = vmatpush1.msra.mxu0 0.0
  %1633 = vmatprep.subr.mxu0 0.0
  %1634 = vmatpush1.msra.mxu0 0.0
  %1635 = vmatprep.subr.mxu0 0.0
  %1636 = vmatpush1.msra.mxu0 0.0
  %1637 = vmatprep.subr.mxu0 0.0
  %1638 = vmatpush1.msra.mxu0 0.0
  %1639 = vmatprep.subr.mxu0 0.0
  %1640 = vmatpush1.msra.mxu0 0.0
  %1641 = vmatprep.subr.mxu0 0.0
  %1642 = vmatpush1.msra.mxu0 0.0
  %1643 = vmatprep.subr.mxu0 0.0
  %1644 = vmatpush1.msra.mxu0 0.0
  %1645 = vmatprep.subr.mxu0 0.0
  %1646 = vmatpush1.msra.mxu0 0.0
  %1647 = vmatprep.subr.mxu0 0.0
  %1648 = vmatpush1.msra.mxu0 0.0
  %1649 = vmatprep.subr.mxu0 0.0
  %1650 = vmatpush1.msra.mxu0 0.0
  %1651 = vmatprep.subr.mxu0 0.0
  %1652 = vmatpush1.msra.mxu0 0.0
  %1653 = vmatprep.subr.mxu0 0.0
  %1654 = vmatpush1.msra.mxu0 0.0
  %1655 = vmatprep.subr.mxu0 0.0
  %1656 = vmatpush1.msra.mxu0 0.0
  %1657 = vmatprep.subr.mxu0 0.0
  %1658 = vmatpush1.msra.mxu0 0.0
  %1659 = vmatprep.subr.mxu0 0.0
  %1660 = vmatpush1.msra.mxu0 0.0
  %1661 = vmatprep.subr.mxu0 0.0
  %1662 = vmatpush1.msra.mxu0 0.0
  %1663 = vmatprep.subr.mxu0 0.0
  %1664 = vmatpush1.msra.mxu0 0.0
  %1665 = vmatprep.subr.mxu0 0.0
  %1666 = vmatpush1.msra.mxu0 0.0
  %1667 = vmatprep.subr.mxu0 0.0
  %1668 = vmatpush1.msra.mxu0 0.0
  %1669 = vmatprep.subr.mxu0 0.0
  %1670 = vmatpush1.msra.mxu0 0.0
  %1671 = vmatprep.subr.mxu0 0.0
  %1672 = vmatpush1.msra.mxu0 0.0
  %1673 = vmatprep.subr.mxu0 0.0
  %1674 = vmatpush1.msra.mxu0 0.0
  %1675 = vmatprep.subr.mxu0 0.0
  %1676 = vmatpush1.msra.mxu0 0.0
  %1677 = vmatprep.subr.mxu0 0.0
  %1678 = vmatpush1.msra.mxu0 0.0
  %1679 = vmatprep.subr.mxu0 0.0
  %1680 = vmatpush1.msra.mxu0 0.0
  %1681 = vmatprep.mubr.f32.mxu0 0.0
  %1682 = vmatmul.mubr.f32.gmra.mrb[0].mxu0 %v1615
  %v1683 = vpop.f32.mrb[0].mxu0
  %v1684 = vadd.f32 0.0, %v1683
  %v1685 = vpop.f32.mrb[0].mxu0
  %1686 = vdwg.mxu0
  %v1687 = vadd.f32 %v327, %v1684
  %v1688 = vmul.f32 %v1687, 0.5
  %v1689 = vtanh.pop %v1688
  %v1690 = vadd.f32 %v1689, 1.0
  %v1691 = vmul.f32 %v1690, 0.5
  %v1692 = vtanh.pop %v1687
  %v1693 = vmul.f32 %v1691, %v1605
  %1695 = vrot.lane.b32.xlu0 %v1692, 64
  %v1696 = vpop.permute.xlu0 %1695
  %v1698 = vmul.f32 %v1691, %v1696
  %1700 = vrot.lane.b32.xlu0 %v1698, 32
  %v1701 = vpop.permute.xlu0 %1700
  %v1703 = vadd.f32 %v1693, %v1701
  %v1704 = vtanh.pop %v1703
  %1706 = vrot.lane.b32.xlu0 %v1704, 64
  %v1707 = vpop.permute.xlu0 %1706
  %v1709 = vmul.f32 %v1691, %v1707
  %1711 = vrot.lane.b32.xlu0 %v1709, 32
  %v1712 = vpop.permute.xlu0 %1711
  %v1713 = vsel %vm62, %v1712, 0
  %1715 = vmatprep.subr.mxu0 0.0
  %1716 = vmatpush1.msra.mxu0 %v39
  %1717 = vmatprep.subr.mxu0 0.0
  %1718 = vmatpush1.msra.mxu0 %v40
  %1719 = vmatprep.subr.mxu0 0.0
  %1720 = vmatpush1.msra.mxu0 %v41
  %1721 = vmatprep.subr.mxu0 0.0
  %1722 = vmatpush1.msra.mxu0 %v42
  %1723 = vmatprep.subr.mxu0 0.0
  %1724 = vmatpush1.msra.mxu0 0.0
  %1725 = vmatprep.subr.mxu0 0.0
  %1726 = vmatpush1.msra.mxu0 0.0
  %1727 = vmatprep.subr.mxu0 0.0
  %1728 = vmatpush1.msra.mxu0 0.0
  %1729 = vmatprep.subr.mxu0 0.0
  %1730 = vmatpush1.msra.mxu0 0.0
  %1731 = vmatprep.subr.mxu0 0.0
  %1732 = vmatpush1.msra.mxu0 0.0
  %1733 = vmatprep.subr.mxu0 0.0
  %1734 = vmatpush1.msra.mxu0 0.0
  %1735 = vmatprep.subr.mxu0 0.0
  %1736 = vmatpush1.msra.mxu0 0.0
  %1737 = vmatprep.subr.mxu0 0.0
  %1738 = vmatpush1.msra.mxu0 0.0
  %1739 = vmatprep.subr.mxu0 0.0
  %1740 = vmatpush1.msra.mxu0 0.0
  %1741 = vmatprep.subr.mxu0 0.0
  %1742 = vmatpush1.msra.mxu0 0.0
  %1743 = vmatprep.subr.mxu0 0.0
  %1744 = vmatpush1.msra.mxu0 0.0
  %1745 = vmatprep.subr.mxu0 0.0
  %1746 = vmatpush1.msra.mxu0 0.0
  %1747 = vmatprep.subr.mxu0 0.0
  %1748 = vmatpush1.msra.mxu0 0.0
  %1749 = vmatprep.subr.mxu0 0.0
  %1750 = vmatpush1.msra.mxu0 0.0
  %1751 = vmatprep.subr.mxu0 0.0
  %1752 = vmatpush1.msra.mxu0 0.0
  %1753 = vmatprep.subr.mxu0 0.0
  %1754 = vmatpush1.msra.mxu0 0.0
  %1755 = vmatprep.subr.mxu0 0.0
  %1756 = vmatpush1.msra.mxu0 0.0
  %1757 = vmatprep.subr.mxu0 0.0
  %1758 = vmatpush1.msra.mxu0 0.0
  %1759 = vmatprep.subr.mxu0 0.0
  %1760 = vmatpush1.msra.mxu0 0.0
  %1761 = vmatprep.subr.mxu0 0.0
  %1762 = vmatpush1.msra.mxu0 0.0
  %1763 = vmatprep.subr.mxu0 0.0
  %1764 = vmatpush1.msra.mxu0 0.0
  %1765 = vmatprep.subr.mxu0 0.0
  %1766 = vmatpush1.msra.mxu0 0.0
  %1767 = vmatprep.subr.mxu0 0.0
  %1768 = vmatpush1.msra.mxu0 0.0
  %1769 = vmatprep.subr.mxu0 0.0
  %1770 = vmatpush1.msra.mxu0 0.0
  %1771 = vmatprep.subr.mxu0 0.0
  %1772 = vmatpush1.msra.mxu0 0.0
  %1773 = vmatprep.subr.mxu0 0.0
  %1774 = vmatpush1.msra.mxu0 0.0
  %1775 = vmatprep.subr.mxu0 0.0
  %1776 = vmatpush1.msra.mxu0 0.0
  %1777 = vmatprep.subr.mxu0 0.0
  %1778 = vmatpush1.msra.mxu0 0.0
  %1779 = vmatprep.mubr.f32.mxu0 0.0
  %1780 = vmatmul.mubr.f32.gmra.mrb[0].mxu0 %v1713
  %v1781 = vpop.f32.mrb[0].mxu0
  %v1782 = vadd.f32 0.0, %v1781
  %v1783 = vpop.f32.mrb[0].mxu0
  %1784 = vdwg.mxu0
  %v1785 = vadd.f32 %v332, %v1782
  %v1786 = vmul.f32 %v1785, 0.5
  %v1787 = vtanh.pop %v1786
  %v1788 = vadd.f32 %v1787, 1.0
  %v1789 = vmul.f32 %v1788, 0.5
  %v1790 = vtanh.pop %v1785
  %v1791 = vmul.f32 %v1789, %v1703
  %1793 = vrot.lane.b32.xlu0 %v1790, 64
  %v1794 = vpop.permute.xlu0 %1793
  %v1796 = vmul.f32 %v1789, %v1794
  %1798 = vrot.lane.b32.xlu0 %v1796, 32
  %v1799 = vpop.permute.xlu0 %1798
  %v1801 = vadd.f32 %v1791, %v1799
  %v1802 = vtanh.pop %v1801
  %1804 = vrot.lane.b32.xlu0 %v1802, 64
  %v1805 = vpop.permute.xlu0 %1804
  %v1807 = vmul.f32 %v1789, %v1805
  %1809 = vrot.lane.b32.xlu0 %v1807, 32
  %v1810 = vpop.permute.xlu0 %1809
  %v1811 = vsel %vm62, %v1810, 0
  %1813 = vmatprep.subr.mxu0 0.0
  %1814 = vmatpush1.msra.mxu0 %v39
  %1815 = vmatprep.subr.mxu0 0.0
  %1816 = vmatpush1.msra.mxu0 %v40
  %1817 = vmatprep.subr.mxu0 0.0
  %1818 = vmatpush1.msra.mxu0 %v41
  %1819 = vmatprep.subr.mxu0 0.0
  %1820 = vmatpush1.msra.mxu0 %v42
  %1821 = vmatprep.subr.mxu0 0.0
  %1822 = vmatpush1.msra.mxu0 0.0
  %1823 = vmatprep.subr.mxu0 0.0
  %1824 = vmatpush1.msra.mxu0 0.0
  %1825 = vmatprep.subr.mxu0 0.0
  %1826 = vmatpush1.msra.mxu0 0.0
  %1827 = vmatprep.subr.mxu0 0.0
  %1828 = vmatpush1.msra.mxu0 0.0
  %1829 = vmatprep.subr.mxu0 0.0
  %1830 = vmatpush1.msra.mxu0 0.0
  %1831 = vmatprep.subr.mxu0 0.0
  %1832 = vmatpush1.msra.mxu0 0.0
  %1833 = vmatprep.subr.mxu0 0.0
  %1834 = vmatpush1.msra.mxu0 0.0
  %1835 = vmatprep.subr.mxu0 0.0
  %1836 = vmatpush1.msra.mxu0 0.0
  %1837 = vmatprep.subr.mxu0 0.0
  %1838 = vmatpush1.msra.mxu0 0.0
  %1839 = vmatprep.subr.mxu0 0.0
  %1840 = vmatpush1.msra.mxu0 0.0
  %1841 = vmatprep.subr.mxu0 0.0
  %1842 = vmatpush1.msra.mxu0 0.0
  %1843 = vmatprep.subr.mxu0 0.0
  %1844 = vmatpush1.msra.mxu0 0.0
  %1845 = vmatprep.subr.mxu0 0.0
  %1846 = vmatpush1.msra.mxu0 0.0
  %1847 = vmatprep.subr.mxu0 0.0
  %1848 = vmatpush1.msra.mxu0 0.0
  %1849 = vmatprep.subr.mxu0 0.0
  %1850 = vmatpush1.msra.mxu0 0.0
  %1851 = vmatprep.subr.mxu0 0.0
  %1852 = vmatpush1.msra.mxu0 0.0
  %1853 = vmatprep.subr.mxu0 0.0
  %1854 = vmatpush1.msra.mxu0 0.0
  %1855 = vmatprep.subr.mxu0 0.0
  %1856 = vmatpush1.msra.mxu0 0.0
  %1857 = vmatprep.subr.mxu0 0.0
  %1858 = vmatpush1.msra.mxu0 0.0
  %1859 = vmatprep.subr.mxu0 0.0
  %1860 = vmatpush1.msra.mxu0 0.0
  %1861 = vmatprep.subr.mxu0 0.0
  %1862 = vmatpush1.msra.mxu0 0.0
  %1863 = vmatprep.subr.mxu0 0.0
  %1864 = vmatpush1.msra.mxu0 0.0
  %1865 = vmatprep.subr.mxu0 0.0
  %1866 = vmatpush1.msra.mxu0 0.0
  %1867 = vmatprep.subr.mxu0 0.0
  %1868 = vmatpush1.msra.mxu0 0.0
  %1869 = vmatprep.subr.mxu0 0.0
  %1870 = vmatpush1.msra.mxu0 0.0
  %1871 = vmatprep.subr.mxu0 0.0
  %1872 = vmatpush1.msra.mxu0 0.0
  %1873 = vmatprep.subr.mxu0 0.0
  %1874 = vmatpush1.msra.mxu0 0.0
  %1875 = vmatprep.subr.mxu0 0.0
  %1876 = vmatpush1.msra.mxu0 0.0
  %1877 = vmatprep.mubr.f32.mxu0 0.0
  %1878 = vmatmul.mubr.f32.gmra.mrb[0].mxu0 %v1811
  %v1879 = vpop.f32.mrb[0].mxu0
  %v1880 = vadd.f32 0.0, %v1879
  %v1881 = vpop.f32.mrb[0].mxu0
  %1882 = vdwg.mxu0
  %v1883 = vadd.f32 %v337, %v1880
  %v1884 = vmul.f32 %v1883, 0.5
  %v1885 = vtanh.pop %v1884
  %v1886 = vadd.f32 %v1885, 1.0
  %v1887 = vmul.f32 %v1886, 0.5
  %v1888 = vtanh.pop %v1883
  %v1889 = vmul.f32 %v1887, %v1801
  %1891 = vrot.lane.b32.xlu0 %v1888, 64
  %v1892 = vpop.permute.xlu0 %1891
  %v1894 = vmul.f32 %v1887, %v1892
  %1896 = vrot.lane.b32.xlu0 %v1894, 32
  %v1897 = vpop.permute.xlu0 %1896
  %v1899 = vadd.f32 %v1889, %v1897
  %v1900 = vtanh.pop %v1899
  %1902 = vrot.lane.b32.xlu0 %v1900, 64
  %v1903 = vpop.permute.xlu0 %1902
  %v1905 = vmul.f32 %v1887, %v1903
  %v1906 = vld [vmem:[%s8] sm:$0xff]
  %v1907 = vld [vmem:[%s8 + $0x8] sm:$0xff]
  %v1908 = vld [vmem:[%s8 + $0x10] sm:$0xff]
  %v1909 = vld [vmem:[%s8 + $0x18] sm:$0xff]
  %v1910 = vld [vmem:[%s9] sm:$0x1]
  %v1912 = vlaneseq
  %v1913 = vshrl.u32 %v1912, 7
  %v1914 = vsub.s32 0, %v1913
  %v1915 = vrot.slane %v1910, %v1914
  %1918 = vrot.lane.b32.xlu0 %v1905, 32
  %v1919 = vpop.permute.xlu0 %1918
  %v1920 = vsel %vm62, %v1919, 0
  %1922 = vmatprep.subr.mxu0 0.0
  %1923 = vmatpush1.msra.mxu0 %v1906
  %1924 = vmatprep.subr.mxu0 0.0
  %1925 = vmatpush1.msra.mxu0 %v1907
  %1926 = vmatprep.subr.mxu0 0.0
  %1927 = vmatpush1.msra.mxu0 %v1908
  %1928 = vmatprep.subr.mxu0 0.0
  %1929 = vmatpush1.msra.mxu0 %v1909
  %1930 = vmatprep.subr.mxu0 0.0
  %1931 = vmatpush1.msra.mxu0 0.0
  %1932 = vmatprep.subr.mxu0 0.0
  %1933 = vmatpush1.msra.mxu0 0.0
  %1934 = vmatprep.subr.mxu0 0.0
  %1935 = vmatpush1.msra.mxu0 0.0
  %1936 = vmatprep.subr.mxu0 0.0
  %1937 = vmatpush1.msra.mxu0 0.0
  %1938 = vmatprep.subr.mxu0 0.0
  %1939 = vmatpush1.msra.mxu0 0.0
  %1940 = vmatprep.subr.mxu0 0.0
  %1941 = vmatpush1.msra.mxu0 0.0
  %1942 = vmatprep.subr.mxu0 0.0
  %1943 = vmatpush1.msra.mxu0 0.0
  %1944 = vmatprep.subr.mxu0 0.0
  %1945 = vmatpush1.msra.mxu0 0.0
  %1946 = vmatprep.subr.mxu0 0.0
  %1947 = vmatpush1.msra.mxu0 0.0
  %1948 = vmatprep.subr.mxu0 0.0
  %1949 = vmatpush1.msra.mxu0 0.0
  %1950 = vmatprep.subr.mxu0 0.0
  %1951 = vmatpush1.msra.mxu0 0.0
  %1952 = vmatprep.subr.mxu0 0.0
  %1953 = vmatpush1.msra.mxu0 0.0
  %1954 = vmatprep.subr.mxu0 0.0
  %1955 = vmatpush1.msra.mxu0 0.0
  %1956 = vmatprep.subr.mxu0 0.0
  %1957 = vmatpush1.msra.mxu0 0.0
  %1958 = vmatprep.subr.mxu0 0.0
  %1959 = vmatpush1.msra.mxu0 0.0
  %1960 = vmatprep.subr.mxu0 0.0
  %1961 = vmatpush1.msra.mxu0 0.0
  %1962 = vmatprep.subr.mxu0 0.0
  %1963 = vmatpush1.msra.mxu0 0.0
  %1964 = vmatprep.subr.mxu0 0.0
  %1965 = vmatpush1.msra.mxu0 0.0
  %1966 = vmatprep.subr.mxu0 0.0
  %1967 = vmatpush1.msra.mxu0 0.0
  %1968 = vmatprep.subr.mxu0 0.0
  %1969 = vmatpush1.msra.mxu0 0.0
  %1970 = vmatprep.subr.mxu0 0.0
  %1971 = vmatpush1.msra.mxu0 0.0
  %1972 = vmatprep.subr.mxu0 0.0
  %1973 = vmatpush1.msra.mxu0 0.0
  %1974 = vmatprep.subr.mxu0 0.0
  %1975 = vmatpush1.msra.mxu0 0.0
  %1976 = vmatprep.subr.mxu0 0.0
  %1977 = vmatpush1.msra.mxu0 0.0
  %1978 = vmatprep.subr.mxu0 0.0
  %1979 = vmatpush1.msra.mxu0 0.0
  %1980 = vmatprep.subr.mxu0 0.0
  %1981 = vmatpush1.msra.mxu0 0.0
  %1982 = vmatprep.subr.mxu0 0.0
  %1983 = vmatpush1.msra.mxu0 0.0
  %1984 = vmatprep.subr.mxu0 0.0
  %1985 = vmatpush1.msra.mxu0 0.0
  %1986 = vmatprep.mubr.f32.mxu0 0.0
  %1987 = vmatmul.mubr.f32.gmra.mrb[0].mxu0 %v1223
  %v1988 = vpop.f32.mrb[0].mxu0
  %v1989 = vadd.f32 %v1915, %v1988
  %v1990 = vpop.f32.mrb[0].mxu0
  %1991 = vmatprep.mubr.f32.mxu0 0.0
  %1992 = vmatmul.mubr.f32.gmra.mrb[0].mxu0 %v1321
  %v1993 = vpop.f32.mrb[0].mxu0
  %v1994 = vadd.f32 %v1915, %v1993
  %v1995 = vpop.f32.mrb[0].mxu0
  %1996 = vmatprep.mubr.f32.mxu0 0.0
  %1997 = vmatmul.mubr.f32.gmra.mrb[0].mxu0 %v1419
  %v1998 = vpop.f32.mrb[0].mxu0
  %v1999 = vadd.f32 %v1915, %v1998
  %v2000 = vpop.f32.mrb[0].mxu0
  %2001 = vmatprep.mubr.f32.mxu0 0.0
  %2002 = vmatmul.mubr.f32.gmra.mrb[0].mxu0 %v1517
  %v2003 = vpop.f32.mrb[0].mxu0
  %v2004 = vadd.f32 %v1915, %v2003
  %v2005 = vpop.f32.mrb[0].mxu0
  %2006 = vmatprep.mubr.f32.mxu0 0.0
  %2007 = vmatmul.mubr.f32.gmra.mrb[0].mxu0 %v1615
  %v2008 = vpop.f32.mrb[0].mxu0
  %v2009 = vadd.f32 %v1915, %v2008
  %v2010 = vpop.f32.mrb[0].mxu0
  %2011 = vmatprep.mubr.f32.mxu0 0.0
  %2012 = vmatmul.mubr.f32.gmra.mrb[0].mxu0 %v1713
  %v2013 = vpop.f32.mrb[0].mxu0
  %v2014 = vadd.f32 %v1915, %v2013
  %v2015 = vpop.f32.mrb[0].mxu0
  %2016 = vmatprep.mubr.f32.mxu0 0.0
  %2017 = vmatmul.mubr.f32.gmra.mrb[0].mxu0 %v1811
  %v2018 = vpop.f32.mrb[0].mxu0
  %v2019 = vadd.f32 %v1915, %v2018
  %v2020 = vpop.f32.mrb[0].mxu0
  %2021 = vmatprep.mubr.f32.mxu0 0.0
  %2022 = vmatmul.mubr.f32.gmra.mrb[0].mxu0 %v1920
  %v2023 = vpop.f32.mrb[0].mxu0
  %v2024 = vadd.f32 %v1915, %v2023
  %v2025 = vpop.f32.mrb[0].mxu0
  %2026 = vdwg.mxu0
  %2027 = vst [vmem:[%s10] sm:$0xff] %v1989
  %2028 = vst [vmem:[%s10 + $0x8] sm:$0xff] %v1994
  %2029 = vst [vmem:[%s10 + $0x10] sm:$0xff] %v1999
  %2030 = vst [vmem:[%s10 + $0x18] sm:$0xff] %v2004
  %2031 = vst [vmem:[%s10 + $0x20] sm:$0xff] %v2009
  %2032 = vst [vmem:[%s10 + $0x28] sm:$0xff] %v2014
  %2033 = vst [vmem:[%s10 + $0x30] sm:$0xff] %v2019
  %2034 = vst [vmem:[%s10 + $0x38] sm:$0xff] %v2024
  // Predicated region
  $region42: #{seq2seq_forward.1} parent=0 // pred_check
    _
  $region43: #{seq2seq_forward.1} parent=0 // pred_check_branch
    %2036 = sbr.rel (0) target = $region45
  $region44: #{seq2seq_forward.1} parent=0 // pred_region
    _
  $region45: #{seq2seq_forward.1} parent=0 // pred_fallthru
    _
  // Predicated region
  $region46: #{seq2seq_forward.1} parent=0 // pred_check
    _
  $region47: #{seq2seq_forward.1} parent=0 // pred_check_branch
    %2038 = sbr.rel (0) target = $region49
  $region48: #{seq2seq_forward.1} parent=0 // pred_region
    _
  $region49: #{seq2seq_forward.1} parent=0 // pred_fallthru
    _

</llo_original>
